<compile_context>
chip_gen: v7x
topology: tpu7x:2x2x1
jax: 0.10.0
libtpu: 0.0.40
codegen_flags: <defaults>
</compile_context>

<pallas_src>
import functools

import jax
import jax.numpy as jnp
import numpy as np
from jax import lax
from jax.experimental import pallas as pl
from jax.experimental.pallas import tpu as pltpu


def attention_kernel(x_ref, w1_ref, w2_ref, wqkv_ref, wo_ref, bo_ref,
                     o_ref, ctx_ref, *, heads, dim_head):
    """Processes Bt batch elements per grid step.

    x_ref    : (Bt, N, P)          input tokens (channel-padded)
    w1_ref   : (P, Rp)     f32     SE fc1 (no bias), reduction dim padded
    w2_ref   : (Rp, P)     f32     SE fc2 (no bias)
    wqkv_ref : (P, 3*H*D)  bf16    fused Q|K|V projection, softmax scale folded into Q
    wo_ref   : (H*D, P)    bf16    fused output projection
    bo_ref   : (1, P)      f32     output projection bias
    o_ref    : (Bt, N, P)          output
    ctx_ref  : (Bt, N, H*D) bf16   VMEM scratch for per-head contexts
    """
    f32 = jnp.float32
    bf16 = jnp.bfloat16
    Bt, N, P = x_ref.shape
    inner = heads * dim_head

    x = x_ref[...].astype(f32)                                           # (Bt, N, P)

    # ---- SELayer: per-element mean over tokens -> channel gate (f32) ----
    m = jnp.mean(x, axis=1)                                              # (Bt, P)
    h1 = jnp.maximum(
        jnp.dot(m, w1_ref[...], preferred_element_type=f32), 0.0)        # (Bt, Rp)
    gate = jax.nn.sigmoid(
        jnp.dot(h1, w2_ref[...], preferred_element_type=f32))            # (Bt, P)
    xs = (x * gate[:, None, :]).astype(bf16).reshape(Bt * N, P)          # (Bt*N, P)

    # ---- single fused QKV projection (bf16 MXU, f32 accumulate), downcast once ----
    qkv = jnp.dot(xs, wqkv_ref[...],
                  preferred_element_type=f32).astype(bf16)               # (Bt*N, 3*inner)

    # ---- per-(batch, head) attention, unrolled; f32 softmax, deferred normalization ----
    # TODO(synk): optional attention-mask branch of the PyTorch module is not implemented
    #             (forward is specialized to mask=None).
    # TODO(synk): for sequence lengths beyond ~1K, switch to query-tiled (flash-style)
    #             online softmax instead of materializing the full (N, N) scores.
    dn = (((1,), (1,)), ((), ()))    # contract last axes: Q @ K^T without a transpose
    for b in range(Bt):
        rows = slice(b * N, (b + 1) * N)
        for h in range(heads):
            qh = qkv[rows, h * dim_head:(h + 1) * dim_head]
            kh = qkv[rows, inner + h * dim_head: inner + (h + 1) * dim_head]
            vh = qkv[rows, 2 * inner + h * dim_head: 2 * inner + (h + 1) * dim_head]
            s = lax.dot_general(qh, kh, dn, preferred_element_type=f32)  # (N, N)
            s = s - jnp.max(s, axis=-1, keepdims=True)
            p = jnp.exp(s)
            rsum = jnp.sum(p, axis=-1, keepdims=True)
            o_h = jnp.dot(p.astype(bf16), vh, preferred_element_type=f32)  # (N, D)
            o_h = o_h * pl.reciprocal(rsum, approx=True)                    # deferred norm
            ctx_ref[b, :, h * dim_head:(h + 1) * dim_head] = o_h.astype(bf16)

    # ---- fused output projection + bias (lane-dense store) ----
    ctx = ctx_ref[...].reshape(Bt * N, inner)                            # (Bt*N, H*D)
    out = jnp.dot(ctx, wo_ref[...], preferred_element_type=f32) + bo_ref[...]
    o_ref[...] = out.reshape(Bt, N, P).astype(o_ref.dtype)


def _choose_batch_tile(B, N, target_rows=256):
    """Smallest divisor Bt of B with Bt*N >= target_rows (fills the MXU M dim);
    otherwise the largest possible (B). Keeps the parallel grid long when it can."""
    for bt in range(1, B + 1):
        if B % bt == 0 and bt * N >= target_rows:
            return bt
    return B


def attention_forward(x, params, *, heads, dim_head):
    """x: (B, N, DIM) float32. params: canonical f32 weights (see make_params)."""
    B, N, DIM = x.shape
    inner = heads * dim_head
    scale = float(DIM) ** (-0.5)        # module scales by dim**-0.5 (not dim_head**-0.5)
    P = ((DIM + 127) // 128) * 128      # lane-pad the channel dim to a multiple of 128
    pc = P - DIM

    red = params["se_w1"].shape[1]
    Rp = ((red + 127) // 128) * 128     # lane-friendly SE reduction dim
    rc = Rp - red

    # Fused QKV weight, scale folded into the Q columns; pad + bf16.
    wqkv = params["wqkv"]                                               # (DIM, 3*inner)
    wqkv = jnp.concatenate([wqkv[:, :inner] * scale, wqkv[:, inner:]], axis=-1)
    wqkv_p = jnp.pad(wqkv, ((0, pc), (0, 0))).astype(jnp.bfloat16)      # (P, 3*inner)
    wo_p = jnp.pad(params["wo_flat"], ((0, 0), (0, pc))).astype(jnp.bfloat16)  # (inner, P)
    bo_p = jnp.pad(params["bo"], ((0, 0), (0, pc)))                     # (1, P) f32
    w1_p = jnp.pad(params["se_w1"], ((0, pc), (0, rc)))                 # (P, Rp) f32
    w2_p = jnp.pad(params["se_w2"], ((0, rc), (0, pc)))                 # (Rp, P) f32
    xp = jnp.pad(x, ((0, 0), (0, 0), (0, pc)))                          # (B, N, P)

    Bt = _choose_batch_tile(B, N)
    grid = (B // Bt,)

    # Explicit VMEM budget: double-buffered in/out blocks + weights + ctx scratch,
    # plus headroom for Mosaic-internal scratch; clamped to v7x's 64 MiB physical VMEM.
    def nbytes(a):
        return int(a.size) * a.dtype.itemsize

    est = 2 * 2 * (Bt * N * P * x.dtype.itemsize)                       # x + out blocks
    est += 2 * sum(nbytes(a) for a in (w1_p, w2_p, wqkv_p, wo_p, bo_p)) # weights (2-buffered)
    est += Bt * N * inner * 2                                           # ctx scratch (bf16)
    est += 8 << 20                                                      # headroom
    vmem_limit = int(min(max(est, 16 << 20), 64 << 20))

    kernel = functools.partial(attention_kernel, heads=heads, dim_head=dim_head)
    out_p = pl.pallas_call(
        kernel,
        out_shape=jax.ShapeDtypeStruct((B, N, P), x.dtype),
        grid_spec=pltpu.PrefetchScalarGridSpec(
            num_scalar_prefetch=0,
            grid=grid,
            in_specs=[
                pl.BlockSpec((Bt, N, P), lambda b: (b, 0, 0)),
                pl.BlockSpec(w1_p.shape, lambda b: (0, 0)),
                pl.BlockSpec(w2_p.shape, lambda b: (0, 0)),
                pl.BlockSpec(wqkv_p.shape, lambda b: (0, 0)),
                pl.BlockSpec(wo_p.shape, lambda b: (0, 0)),
                pl.BlockSpec(bo_p.shape, lambda b: (0, 0)),
            ],
            out_specs=pl.BlockSpec((Bt, N, P), lambda b: (b, 0, 0)),
            scratch_shapes=[pltpu.VMEM((Bt, N, inner), jnp.bfloat16)],
        ),
        compiler_params=pltpu.CompilerParams(
            dimension_semantics=("parallel",),
            vmem_limit_bytes=vmem_limit),
    )(xp, w1_p, w2_p, wqkv_p, wo_p, bo_p)
    return out_p[:, :, :DIM]


def make_params(key, dim, heads, dim_head, reduction=16):
    inner = heads * dim_head
    red = max(dim // reduction, 1)
    ks = jax.random.split(key, 5)
    # SELayer fc: Linear(dim, dim//red, bias=False) then Linear(dim//red, dim, bias=False)
    se_w1 = jax.random.normal(ks[0], (dim, red), jnp.float32) * 0.1
    se_w2 = jax.random.normal(ks[1], (red, dim), jnp.float32) * 0.1
    # to_qkv: Linear(dim, 3*inner, bias=False), stored input-major (dim, 3*inner)
    wqkv = jax.random.normal(ks[2], (dim, 3 * inner), jnp.float32) * 0.05
    # to_out[0]: Linear(inner, dim) with bias; input-major (inner, dim)
    wo_flat = jax.random.normal(ks[3], (inner, dim), jnp.float32) * 0.05
    bo = jax.random.normal(ks[4], (1, dim), jnp.float32) * 0.01
    # dropout p=0.0 (eval mode) -> identity; nothing to translate.
    return {"se_w1": se_w1, "se_w2": se_w2, "wqkv": wqkv,
            "wo_flat": wo_flat, "bo": bo}


def reference_forward(x, params, *, heads, dim_head):
    """Pure-JAX f32 reference mirroring the PyTorch forward (mask=None, eval mode)."""
    B, N, DIM = x.shape
    inner = heads * dim_head
    # SELayer
    gate = jax.nn.sigmoid(
        jnp.maximum(jnp.mean(x, axis=1) @ params["se_w1"], 0.0) @ params["se_w2"])
    xs = x * gate[:, None, :]
    # qkv
    qkv = xs @ params["wqkv"]                                   # (B, N, 3*inner)
    q, k, v = jnp.split(qkv, 3, axis=-1)

    def to_heads(t):
        return t.reshape(B, N, heads, dim_head).transpose(0, 2, 1, 3)  # (B,H,N,D)

    q, k, v = to_heads(q), to_heads(k), to_heads(v)
    dots = jnp.einsum("bhid,bhjd->bhij", q, k) * (float(DIM) ** -0.5)
    attn = jax.nn.softmax(dots, axis=-1)
    out = jnp.einsum("bhij,bhjd->bhid", attn, v)
    out = out.transpose(0, 2, 1, 3).reshape(B, N, inner)
    return out @ params["wo_flat"] + params["bo"]


if __name__ == "__main__":
    B, N, DIM = 2, 8, 32
    HEADS, DIM_HEAD = 2, 64   # inner_dim = 128

    key = jax.random.PRNGKey(0)
    kx, kp = jax.random.split(key)
    x = jax.random.normal(kx, (B, N, DIM), jnp.float32)
    params = make_params(kp, DIM, HEADS, DIM_HEAD)

    out = attention_forward(x, params, heads=HEADS, dim_head=DIM_HEAD)
    out = jax.block_until_ready(out)

    ref = reference_forward(x, params, heads=HEADS, dim_head=DIM_HEAD)
    # bf16 matmul operands (f32 accumulation) + approx reciprocal -> bf16-level tolerance.
    np.testing.assert_allclose(np.asarray(out), np.asarray(ref), rtol=2e-2, atol=5e-3)

    print("KERNEL_OK")
</pallas_src>

<mosaic_0001>
module attributes {stable_mosaic.version = 11 : i64} {
  func.func @attention_kernel(%arg0: i32, %arg1: memref<2x8x128xf32, #tpu.memory_space<vmem>>, %arg2: memref<128x128xf32, #tpu.memory_space<vmem>>, %arg3: memref<128x128xf32, #tpu.memory_space<vmem>>, %arg4: memref<128x384xbf16, #tpu.memory_space<vmem>>, %arg5: memref<128x128xbf16, #tpu.memory_space<vmem>>, %arg6: memref<1x128xf32, #tpu.memory_space<vmem>>, %arg7: memref<2x8x128xf32, #tpu.memory_space<vmem>>, %arg8: memref<2x8x128xbf16, #tpu.memory_space<vmem>>) attributes {dimension_semantics = [#tpu.dimension_semantics<parallel>], iteration_bounds = array<i64: 1>, scalar_prefetch = 0 : i64, scratch_operands = 1 : i64, tpu.core_type = #tpu.core_type<tc>, window_params = [{transform_indices = @transform_0, window_bounds = array<i64: 2, 8, 128>}, {pipeline_mode = #tpu.pipeline_mode<synchronous>, transform_indices = @transform_1, window_bounds = array<i64: 128, 128>}, {pipeline_mode = #tpu.pipeline_mode<synchronous>, transform_indices = @transform_2, window_bounds = array<i64: 128, 128>}, {pipeline_mode = #tpu.pipeline_mode<synchronous>, transform_indices = @transform_3, window_bounds = array<i64: 128, 384>}, {pipeline_mode = #tpu.pipeline_mode<synchronous>, transform_indices = @transform_4, window_bounds = array<i64: 128, 128>}, {pipeline_mode = #tpu.pipeline_mode<synchronous>, transform_indices = @transform_5, window_bounds = array<i64: 1, 128>}, {transform_indices = @transform_6, window_bounds = array<i64: 2, 8, 128>}]} {
    %c0 = arith.constant 0 : index
    %c0_0 = arith.constant 0 : index
    %c0_1 = arith.constant 0 : index
    %0 = vector.load %arg1[%c0, %c0_0, %c0_1] : memref<2x8x128xf32, #tpu.memory_space<vmem>>, vector<2x8x128xf32>
    %cst = arith.constant dense<0.000000e+00> : vector<2x128xf32>
    %1 = vector.multi_reduction <add>, %0, %cst [1] : vector<2x8x128xf32> to vector<2x128xf32>
    %cst_2 = arith.constant 8.000000e+00 : f32
    %2 = vector.broadcast %cst_2 : f32 to vector<2x128xf32>
    %3 = arith.divf %1, %2 : vector<2x128xf32>
    %c0_3 = arith.constant 0 : index
    %c0_4 = arith.constant 0 : index
    %4 = vector.load %arg2[%c0_3, %c0_4] : memref<128x128xf32, #tpu.memory_space<vmem>>, vector<128x128xf32>
    %cst_5 = arith.constant dense<0.000000e+00> : vector<2x128xf32>
    %5 = tpu.matmul %3, %4, %cst_5 {dimension_numbers = #tpu.dot_dimension_numbers<[1], [0], [0], [1], [0, 0, 1, 1], [], []>} : vector<2x128xf32>, vector<128x128xf32>, vector<2x128xf32> -> vector<2x128xf32>
    %cst_6 = arith.constant 0.000000e+00 : f32
    %6 = vector.broadcast %cst_6 : f32 to vector<2x128xf32>
    %7 = arith.maximumf %5, %6 : vector<2x128xf32>
    %c0_7 = arith.constant 0 : index
    %c0_8 = arith.constant 0 : index
    %8 = vector.load %arg3[%c0_7, %c0_8] : memref<128x128xf32, #tpu.memory_space<vmem>>, vector<128x128xf32>
    %cst_9 = arith.constant dense<0.000000e+00> : vector<2x128xf32>
    %9 = tpu.matmul %7, %8, %cst_9 {dimension_numbers = #tpu.dot_dimension_numbers<[1], [0], [0], [1], [0, 0, 1, 1], [], []>} : vector<2x128xf32>, vector<128x128xf32>, vector<2x128xf32> -> vector<2x128xf32>
    %10 = arith.negf %9 : vector<2x128xf32>
    %11 = math.exp %10 : vector<2x128xf32>
    %cst_10 = arith.constant 1.000000e+00 : f32
    %12 = vector.broadcast %cst_10 : f32 to vector<2x128xf32>
    %13 = arith.addf %12, %11 : vector<2x128xf32>
    %14 = arith.divf %12, %13 : vector<2x128xf32>
    %15 = vector.shape_cast %14 : vector<2x128xf32> to vector<2x1x128xf32>
    %16 = vector.broadcast %15 : vector<2x1x128xf32> to vector<2x8x128xf32>
    %17 = arith.mulf %0, %16 : vector<2x8x128xf32>
    %18 = arith.truncf %17 : vector<2x8x128xf32> to vector<2x8x128xbf16>
    %19 = vector.shape_cast %18 : vector<2x8x128xbf16> to vector<16x128xbf16>
    %c0_11 = arith.constant 0 : index
    %c0_12 = arith.constant 0 : index
    %20 = vector.load %arg4[%c0_11, %c0_12] : memref<128x384xbf16, #tpu.memory_space<vmem>>, vector<128x384xbf16>
    %cst_13 = arith.constant dense<0.000000e+00> : vector<16x384xf32>
    %21 = tpu.matmul %19, %20, %cst_13 {dimension_numbers = #tpu.dot_dimension_numbers<[1], [0], [0], [1], [0, 0, 1, 1], [], []>} : vector<16x128xbf16>, vector<128x384xbf16>, vector<16x384xf32> -> vector<16x384xf32>
    %22 = arith.truncf %21 : vector<16x384xf32> to vector<16x384xbf16>
    %23 = vector.extract_strided_slice %22 {offsets = [0, 0], sizes = [8, 64], strides = [1, 1]} : vector<16x384xbf16> to vector<8x64xbf16>
    %24 = vector.extract_strided_slice %22 {offsets = [0, 128], sizes = [8, 64], strides = [1, 1]} : vector<16x384xbf16> to vector<8x64xbf16>
    %25 = vector.extract_strided_slice %22 {offsets = [0, 256], sizes = [8, 64], strides = [1, 1]} : vector<16x384xbf16> to vector<8x64xbf16>
    %cst_14 = arith.constant dense<0.000000e+00> : vector<8x8xf32>
    %26 = tpu.matmul %23, %24, %cst_14 {dimension_numbers = #tpu.dot_dimension_numbers<[1], [1], [0], [0], [0, 0, 1, 0], [], []>} : vector<8x64xbf16>, vector<8x64xbf16>, vector<8x8xf32> -> vector<8x8xf32>
    %cst_15 = arith.constant dense<0xFF800000> : vector<8xf32>
    %27 = vector.multi_reduction <maximumf>, %26, %cst_15 [1] : vector<8x8xf32> to vector<8xf32>
    %28 = vector.shape_cast %27 : vector<8xf32> to vector<8x1xf32>
    %29 = vector.broadcast %28 : vector<8x1xf32> to vector<8x8xf32>
    %30 = arith.subf %26, %29 : vector<8x8xf32>
    %31 = math.exp %30 : vector<8x8xf32>
    %cst_16 = arith.constant dense<0.000000e+00> : vector<8xf32>
    %32 = vector.multi_reduction <add>, %31, %cst_16 [1] : vector<8x8xf32> to vector<8xf32>
    %33 = vector.shape_cast %32 : vector<8xf32> to vector<8x1xf32>
    %34 = arith.truncf %31 : vector<8x8xf32> to vector<8x8xbf16>
    %cst_17 = arith.constant dense<0.000000e+00> : vector<8x64xf32>
    %35 = tpu.matmul %34, %25, %cst_17 {dimension_numbers = #tpu.dot_dimension_numbers<[1], [0], [0], [1], [0, 0, 1, 1], [], []>} : vector<8x8xbf16>, vector<8x64xbf16>, vector<8x64xf32> -> vector<8x64xf32>
    %36 = tpu.reciprocal %33 {approx = true} : vector<8x1xf32> -> vector<8x1xf32>
    %37 = vector.broadcast %36 : vector<8x1xf32> to vector<8x64xf32>
    %38 = arith.mulf %35, %37 : vector<8x64xf32>
    %39 = arith.truncf %38 : vector<8x64xf32> to vector<8x64xbf16>
    %c0_18 = arith.constant 0 : index
    %c0_19 = arith.constant 0 : index
    %c0_20 = arith.constant 0 : index
    %40 = vector.load %arg8[%c0_18, %c0_19, %c0_20] : memref<2x8x128xbf16, #tpu.memory_space<vmem>>, vector<1x8x64xbf16>
    %41 = vector.shape_cast %40 : vector<1x8x64xbf16> to vector<8x64xbf16>
    %42 = vector.shape_cast %39 : vector<8x64xbf16> to vector<1x8x64xbf16>
    tpu.vector_store %arg8[%c0_18, %c0_19, %c0_20], %42 {strides = array<i32>} : memref<2x8x128xbf16, #tpu.memory_space<vmem>>, vector<1x8x64xbf16>,
    %43 = vector.extract_strided_slice %22 {offsets = [0, 64], sizes = [8, 64], strides = [1, 1]} : vector<16x384xbf16> to vector<8x64xbf16>
    %44 = vector.extract_strided_slice %22 {offsets = [0, 192], sizes = [8, 64], strides = [1, 1]} : vector<16x384xbf16> to vector<8x64xbf16>
    %45 = vector.extract_strided_slice %22 {offsets = [0, 320], sizes = [8, 64], strides = [1, 1]} : vector<16x384xbf16> to vector<8x64xbf16>
    %cst_21 = arith.constant dense<0.000000e+00> : vector<8x8xf32>
    %46 = tpu.matmul %43, %44, %cst_21 {dimension_numbers = #tpu.dot_dimension_numbers<[1], [1], [0], [0], [0, 0, 1, 0], [], []>} : vector<8x64xbf16>, vector<8x64xbf16>, vector<8x8xf32> -> vector<8x8xf32>
    %cst_22 = arith.constant dense<0xFF800000> : vector<8xf32>
    %47 = vector.multi_reduction <maximumf>, %46, %cst_22 [1] : vector<8x8xf32> to vector<8xf32>
    %48 = vector.shape_cast %47 : vector<8xf32> to vector<8x1xf32>
    %49 = vector.broadcast %48 : vector<8x1xf32> to vector<8x8xf32>
    %50 = arith.subf %46, %49 : vector<8x8xf32>
    %51 = math.exp %50 : vector<8x8xf32>
    %cst_23 = arith.constant dense<0.000000e+00> : vector<8xf32>
    %52 = vector.multi_reduction <add>, %51, %cst_23 [1] : vector<8x8xf32> to vector<8xf32>
    %53 = vector.shape_cast %52 : vector<8xf32> to vector<8x1xf32>
    %54 = arith.truncf %51 : vector<8x8xf32> to vector<8x8xbf16>
    %cst_24 = arith.constant dense<0.000000e+00> : vector<8x64xf32>
    %55 = tpu.matmul %54, %45, %cst_24 {dimension_numbers = #tpu.dot_dimension_numbers<[1], [0], [0], [1], [0, 0, 1, 1], [], []>} : vector<8x8xbf16>, vector<8x64xbf16>, vector<8x64xf32> -> vector<8x64xf32>
    %56 = tpu.reciprocal %53 {approx = true} : vector<8x1xf32> -> vector<8x1xf32>
    %57 = vector.broadcast %56 : vector<8x1xf32> to vector<8x64xf32>
    %58 = arith.mulf %55, %57 : vector<8x64xf32>
    %59 = arith.truncf %58 : vector<8x64xf32> to vector<8x64xbf16>
    %c0_25 = arith.constant 0 : index
    %c0_26 = arith.constant 0 : index
    %c64 = arith.constant 64 : index
    %60 = vector.load %arg8[%c0_25, %c0_26, %c64] : memref<2x8x128xbf16, #tpu.memory_space<vmem>>, vector<1x8x64xbf16>
    %61 = vector.shape_cast %60 : vector<1x8x64xbf16> to vector<8x64xbf16>
    %62 = vector.shape_cast %59 : vector<8x64xbf16> to vector<1x8x64xbf16>
    tpu.vector_store %arg8[%c0_25, %c0_26, %c64], %62 {strides = array<i32>} : memref<2x8x128xbf16, #tpu.memory_space<vmem>>, vector<1x8x64xbf16>,
    %63 = vector.extract_strided_slice %22 {offsets = [8, 0], sizes = [8, 64], strides = [1, 1]} : vector<16x384xbf16> to vector<8x64xbf16>
    %64 = vector.extract_strided_slice %22 {offsets = [8, 128], sizes = [8, 64], strides = [1, 1]} : vector<16x384xbf16> to vector<8x64xbf16>
    %65 = vector.extract_strided_slice %22 {offsets = [8, 256], sizes = [8, 64], strides = [1, 1]} : vector<16x384xbf16> to vector<8x64xbf16>
    %cst_27 = arith.constant dense<0.000000e+00> : vector<8x8xf32>
    %66 = tpu.matmul %63, %64, %cst_27 {dimension_numbers = #tpu.dot_dimension_numbers<[1], [1], [0], [0], [0, 0, 1, 0], [], []>} : vector<8x64xbf16>, vector<8x64xbf16>, vector<8x8xf32> -> vector<8x8xf32>
    %cst_28 = arith.constant dense<0xFF800000> : vector<8xf32>
    %67 = vector.multi_reduction <maximumf>, %66, %cst_28 [1] : vector<8x8xf32> to vector<8xf32>
    %68 = vector.shape_cast %67 : vector<8xf32> to vector<8x1xf32>
    %69 = vector.broadcast %68 : vector<8x1xf32> to vector<8x8xf32>
    %70 = arith.subf %66, %69 : vector<8x8xf32>
    %71 = math.exp %70 : vector<8x8xf32>
    %cst_29 = arith.constant dense<0.000000e+00> : vector<8xf32>
    %72 = vector.multi_reduction <add>, %71, %cst_29 [1] : vector<8x8xf32> to vector<8xf32>
    %73 = vector.shape_cast %72 : vector<8xf32> to vector<8x1xf32>
    %74 = arith.truncf %71 : vector<8x8xf32> to vector<8x8xbf16>
    %cst_30 = arith.constant dense<0.000000e+00> : vector<8x64xf32>
    %75 = tpu.matmul %74, %65, %cst_30 {dimension_numbers = #tpu.dot_dimension_numbers<[1], [0], [0], [1], [0, 0, 1, 1], [], []>} : vector<8x8xbf16>, vector<8x64xbf16>, vector<8x64xf32> -> vector<8x64xf32>
    %76 = tpu.reciprocal %73 {approx = true} : vector<8x1xf32> -> vector<8x1xf32>
    %77 = vector.broadcast %76 : vector<8x1xf32> to vector<8x64xf32>
    %78 = arith.mulf %75, %77 : vector<8x64xf32>
    %79 = arith.truncf %78 : vector<8x64xf32> to vector<8x64xbf16>
    %c1 = arith.constant 1 : index
    %c0_31 = arith.constant 0 : index
    %c0_32 = arith.constant 0 : index
    %80 = vector.load %arg8[%c1, %c0_31, %c0_32] : memref<2x8x128xbf16, #tpu.memory_space<vmem>>, vector<1x8x64xbf16>
    %81 = vector.shape_cast %80 : vector<1x8x64xbf16> to vector<8x64xbf16>
    %82 = vector.shape_cast %79 : vector<8x64xbf16> to vector<1x8x64xbf16>
    tpu.vector_store %arg8[%c1, %c0_31, %c0_32], %82 {strides = array<i32>} : memref<2x8x128xbf16, #tpu.memory_space<vmem>>, vector<1x8x64xbf16>,
    %83 = vector.extract_strided_slice %22 {offsets = [8, 64], sizes = [8, 64], strides = [1, 1]} : vector<16x384xbf16> to vector<8x64xbf16>
    %84 = vector.extract_strided_slice %22 {offsets = [8, 192], sizes = [8, 64], strides = [1, 1]} : vector<16x384xbf16> to vector<8x64xbf16>
    %85 = vector.extract_strided_slice %22 {offsets = [8, 320], sizes = [8, 64], strides = [1, 1]} : vector<16x384xbf16> to vector<8x64xbf16>
    %cst_33 = arith.constant dense<0.000000e+00> : vector<8x8xf32>
    %86 = tpu.matmul %83, %84, %cst_33 {dimension_numbers = #tpu.dot_dimension_numbers<[1], [1], [0], [0], [0, 0, 1, 0], [], []>} : vector<8x64xbf16>, vector<8x64xbf16>, vector<8x8xf32> -> vector<8x8xf32>
    %cst_34 = arith.constant dense<0xFF800000> : vector<8xf32>
    %87 = vector.multi_reduction <maximumf>, %86, %cst_34 [1] : vector<8x8xf32> to vector<8xf32>
    %88 = vector.shape_cast %87 : vector<8xf32> to vector<8x1xf32>
    %89 = vector.broadcast %88 : vector<8x1xf32> to vector<8x8xf32>
    %90 = arith.subf %86, %89 : vector<8x8xf32>
    %91 = math.exp %90 : vector<8x8xf32>
    %cst_35 = arith.constant dense<0.000000e+00> : vector<8xf32>
    %92 = vector.multi_reduction <add>, %91, %cst_35 [1] : vector<8x8xf32> to vector<8xf32>
    %93 = vector.shape_cast %92 : vector<8xf32> to vector<8x1xf32>
    %94 = arith.truncf %91 : vector<8x8xf32> to vector<8x8xbf16>
    %cst_36 = arith.constant dense<0.000000e+00> : vector<8x64xf32>
    %95 = tpu.matmul %94, %85, %cst_36 {dimension_numbers = #tpu.dot_dimension_numbers<[1], [0], [0], [1], [0, 0, 1, 1], [], []>} : vector<8x8xbf16>, vector<8x64xbf16>, vector<8x64xf32> -> vector<8x64xf32>
    %96 = tpu.reciprocal %93 {approx = true} : vector<8x1xf32> -> vector<8x1xf32>
    %97 = vector.broadcast %96 : vector<8x1xf32> to vector<8x64xf32>
    %98 = arith.mulf %95, %97 : vector<8x64xf32>
    %99 = arith.truncf %98 : vector<8x64xf32> to vector<8x64xbf16>
    %c1_37 = arith.constant 1 : index
    %c0_38 = arith.constant 0 : index
    %c64_39 = arith.constant 64 : index
    %100 = vector.load %arg8[%c1_37, %c0_38, %c64_39] : memref<2x8x128xbf16, #tpu.memory_space<vmem>>, vector<1x8x64xbf16>
    %101 = vector.shape_cast %100 : vector<1x8x64xbf16> to vector<8x64xbf16>
    %102 = vector.shape_cast %99 : vector<8x64xbf16> to vector<1x8x64xbf16>
    tpu.vector_store %arg8[%c1_37, %c0_38, %c64_39], %102 {strides = array<i32>} : memref<2x8x128xbf16, #tpu.memory_space<vmem>>, vector<1x8x64xbf16>,
    %c0_40 = arith.constant 0 : index
    %c0_41 = arith.constant 0 : index
    %c0_42 = arith.constant 0 : index
    %103 = vector.load %arg8[%c0_40, %c0_41, %c0_42] : memref<2x8x128xbf16, #tpu.memory_space<vmem>>, vector<2x8x128xbf16>
    %104 = vector.shape_cast %103 : vector<2x8x128xbf16> to vector<16x128xbf16>
    %c0_43 = arith.constant 0 : index
    %c0_44 = arith.constant 0 : index
    %105 = vector.load %arg5[%c0_43, %c0_44] : memref<128x128xbf16, #tpu.memory_space<vmem>>, vector<128x128xbf16>
    %cst_45 = arith.constant dense<0.000000e+00> : vector<16x128xf32>
    %106 = tpu.matmul %104, %105, %cst_45 {dimension_numbers = #tpu.dot_dimension_numbers<[1], [0], [0], [1], [0, 0, 1, 1], [], []>} : vector<16x128xbf16>, vector<128x128xbf16>, vector<16x128xf32> -> vector<16x128xf32>
    %c0_46 = arith.constant 0 : index
    %c0_47 = arith.constant 0 : index
    %107 = vector.load %arg6[%c0_46, %c0_47] : memref<1x128xf32, #tpu.memory_space<vmem>>, vector<1x128xf32>
    %108 = vector.broadcast %107 : vector<1x128xf32> to vector<16x128xf32>
    %109 = arith.addf %106, %108 : vector<16x128xf32>
    %110 = vector.shape_cast %109 : vector<16x128xf32> to vector<2x8x128xf32>
    %c0_48 = arith.constant 0 : index
    %c0_49 = arith.constant 0 : index
    %c0_50 = arith.constant 0 : index
    %111 = vector.load %arg7[%c0_48, %c0_49, %c0_50] : memref<2x8x128xf32, #tpu.memory_space<vmem>>, vector<2x8x128xf32>
    tpu.vector_store %arg7[%c0_48, %c0_49, %c0_50], %110 {strides = array<i32>} : memref<2x8x128xf32, #tpu.memory_space<vmem>>, vector<2x8x128xf32>,
    return
  }
  func.func @transform_0(%arg0: i32) -> (i32, i32, i32) {
    %c0_i32 = arith.constant 0 : i32
    %c0_i32_0 = arith.constant 0 : i32
    %c0_i32_1 = arith.constant 0 : i32
    return %arg0, %c0_i32, %c0_i32_0 : i32, i32, i32
  }
  func.func @transform_1(%arg0: i32) -> (i32, i32) {
    %c0_i32 = arith.constant 0 : i32
    %c0_i32_0 = arith.constant 0 : i32
    %c0_i32_1 = arith.constant 0 : i32
    return %c0_i32, %c0_i32_0 : i32, i32
  }
  func.func @transform_2(%arg0: i32) -> (i32, i32) {
    %c0_i32 = arith.constant 0 : i32
    %c0_i32_0 = arith.constant 0 : i32
    %c0_i32_1 = arith.constant 0 : i32
    return %c0_i32, %c0_i32_0 : i32, i32
  }
  func.func @transform_3(%arg0: i32) -> (i32, i32) {
    %c0_i32 = arith.constant 0 : i32
    %c0_i32_0 = arith.constant 0 : i32
    %c0_i32_1 = arith.constant 0 : i32
    return %c0_i32, %c0_i32_0 : i32, i32
  }
  func.func @transform_4(%arg0: i32) -> (i32, i32) {
    %c0_i32 = arith.constant 0 : i32
    %c0_i32_0 = arith.constant 0 : i32
    %c0_i32_1 = arith.constant 0 : i32
    return %c0_i32, %c0_i32_0 : i32, i32
  }
  func.func @transform_5(%arg0: i32) -> (i32, i32) {
    %c0_i32 = arith.constant 0 : i32
    %c0_i32_0 = arith.constant 0 : i32
    %c0_i32_1 = arith.constant 0 : i32
    return %c0_i32, %c0_i32_0 : i32, i32
  }
  func.func @transform_6(%arg0: i32) -> (i32, i32, i32) {
    %c0_i32 = arith.constant 0 : i32
    %c0_i32_0 = arith.constant 0 : i32
    %c0_i32_1 = arith.constant 0 : i32
    return %arg0, %c0_i32, %c0_i32_0 : i32, i32, i32
  }
}

</mosaic_0001>

<llo_original>
// kernel: tpu_custom_call.1
$region0: #{tpu_custom_call.1}
  #allocation0 [shape = 'u32[]', space=smem, size = 0x4, offset = 0x4, fixed_abs, tag = 'smem constant byte address 0x4 - core index']
  #allocation1 [shape = 'u32[144,128]{1,0:T(1,128)}', space=vmem, size = 0x12000, scoped, tag = 'internal scratch']
  #allocation2 [shape = 'bf16[2,8,128]{2,1,0:T(8,128)(2,1)}', space=vmem, size = 0x1000, scoped, tag = 'scratch operand']
  %s0 = inlined_call_operand.hbm [shape: f32[2,8,128], index: 0, kind: input, shape index: {}]
  %s1 = inlined_call_operand.hbm [shape: f32[128,128], index: 1, kind: input, shape index: {}]
  %s2 = inlined_call_operand.hbm [shape: f32[128,128], index: 2, kind: input, shape index: {}]
  %s3 = inlined_call_operand.hbm [shape: bf16[128,384], index: 3, kind: input, shape index: {}]
  %s4 = inlined_call_operand.hbm [shape: bf16[128,128], index: 4, kind: input, shape index: {}]
  %s5 = inlined_call_operand.vmem [shape: f32[1,128], index: 5, kind: input, shape index: {}]
  %s6 = inlined_call_operand.hbm [shape: f32[2,8,128], index: 6, kind: output, shape index: {}]
  %s7 = sld [smem:[#allocation0]]
  $region54: #{tpu_custom_call.1} parent=0
    _
  %s9 = ssub.s32 1, %s7
  %s10 = scalar_select 0, %s9, %s7
  $region1: #{tpu_custom_call.1} parent=0
    #allocation3 [shape = 'u8[8192]{0}', space=vmem, size = 0x2000, scoped, tag = 'input window, operand 0, single buffered']
    #allocation4 [shape = 's32[1]{0}', space=sflag, size = 0x4, scoped, tag = 'scoped memory for tpu_custom_call.1']
    #allocation5 [shape = 's32[1]{0}', space=sflag, size = 0x4, scoped, tag = 'scoped memory for tpu_custom_call.1']
    #allocation6 [shape = 'u8[65536]{0}', space=vmem, size = 0x10000, scoped, tag = 'input window, operand 1, single buffered']
    #allocation7 [shape = 's32[1]{0}', space=sflag, size = 0x4, scoped, tag = 'scoped memory for tpu_custom_call.1']
    #allocation8 [shape = 'u8[65536]{0}', space=vmem, size = 0x10000, scoped, tag = 'input window, operand 2, single buffered']
    #allocation9 [shape = 'u8[98304]{0}', space=vmem, size = 0x18000, scoped, tag = 'input window, operand 3, single buffered']
    #allocation10 [shape = 's32[1]{0}', space=sflag, size = 0x4, scoped, tag = 'scoped memory for tpu_custom_call.1']
    #allocation11 [shape = 'u8[32768]{0}', space=vmem, size = 0x8000, scoped, tag = 'input window, operand 4, single buffered']
    #allocation12 [shape = 'u8[8192]{0}', space=vmem, size = 0x2000, scoped, tag = 'output window, operand 0, single buffered']
    %11 = vsyncpa [#allocation4], 0
    %12 = vsyncpa [#allocation7], 0
    %13 = vsyncpa [#allocation10], 0
    %14 = vsyncpa [#allocation5], 0
    // Predicated region
    $region2: #{tpu_custom_call.1} parent=1 // pred_check
      _
    $region3: #{tpu_custom_call.1} parent=1 // pred_check_branch
      %16 = sbr.rel (0) target = $region5
    $region4: #{tpu_custom_call.1} parent=1 // pred_region
      %s18 = ssub.s32 256, 256
      %19 = vsyncadd [#allocation4], %s18
      %s20 = sshll.u32 [#allocation3], 4
      %s21 = int_to_ptr.vmem [resolvable:$true] %s20
      %26 = dma.hbm_to_vmem [thread:$0]  %s0, 256, %s21, [#allocation4], 128, 128, 8
    $region5: #{tpu_custom_call.1} parent=1 // pred_fallthru
      _
    // Predicated region
    $region6: #{tpu_custom_call.1} parent=1 // pred_check
      _
    $region7: #{tpu_custom_call.1} parent=1 // pred_check_branch
      %28 = sbr.rel (0) target = $region9
    $region8: #{tpu_custom_call.1} parent=1 // pred_region
      %s30 = ssub.s32 2048, 2048
      %31 = vsyncadd [#allocation7], %s30
      %s32 = sshll.u32 [#allocation6], 4
      %s33 = int_to_ptr.vmem [resolvable:$true] %s32
      %38 = dma.hbm_to_vmem [thread:$0]  %s1, 2048, %s33, [#allocation7], 128, 128, 8
    $region9: #{tpu_custom_call.1} parent=1 // pred_fallthru
      _
    // Predicated region
    $region10: #{tpu_custom_call.1} parent=1 // pred_check
      _
    $region11: #{tpu_custom_call.1} parent=1 // pred_check_branch
      %40 = sbr.rel (0) target = $region13
    $region12: #{tpu_custom_call.1} parent=1 // pred_region
      %s42 = ssub.s32 2048, 2048
      %43 = vsyncadd [#allocation7], %s42
      %s44 = sshll.u32 [#allocation8], 4
      %s45 = int_to_ptr.vmem [resolvable:$true] %s44
      %50 = dma.hbm_to_vmem [thread:$0]  %s2, 2048, %s45, [#allocation7], 128, 128, 8
    $region13: #{tpu_custom_call.1} parent=1 // pred_fallthru
      _
    // Predicated region
    $region14: #{tpu_custom_call.1} parent=1 // pred_check
      _
    $region15: #{tpu_custom_call.1} parent=1 // pred_check_branch
      %52 = sbr.rel (0) target = $region17
    $region16: #{tpu_custom_call.1} parent=1 // pred_region
      %s54 = ssub.s32 3072, 3072
      %55 = vsyncadd [#allocation10], %s54
      %s56 = sshll.u32 [#allocation9], 4
      %s57 = int_to_ptr.vmem [resolvable:$true] %s56
      %62 = dma.hbm_to_vmem [thread:$0]  %s3, 3072, %s57, [#allocation10], 192, 192, 12
    $region17: #{tpu_custom_call.1} parent=1 // pred_fallthru
      _
    // Predicated region
    $region18: #{tpu_custom_call.1} parent=1 // pred_check
      _
    $region19: #{tpu_custom_call.1} parent=1 // pred_check_branch
      %64 = sbr.rel (0) target = $region21
    $region20: #{tpu_custom_call.1} parent=1 // pred_region
      %s66 = ssub.s32 1024, 1024
      %67 = vsyncadd [#allocation10], %s66
      %s68 = sshll.u32 [#allocation11], 4
      %s69 = int_to_ptr.vmem [resolvable:$true] %s68
      %74 = dma.hbm_to_vmem [thread:$0]  %s4, 1024, %s69, [#allocation10], 64, 64, 4
    $region21: #{tpu_custom_call.1} parent=1 // pred_fallthru
      _
    // Predicated region
    $region22: #{tpu_custom_call.1} parent=1 // pred_check
      _
    $region23: #{tpu_custom_call.1} parent=1 // pred_check_branch
      %76 = sbr.rel (0) target = $region25
    $region24: #{tpu_custom_call.1} parent=1 // pred_region
      _
    $region25: #{tpu_custom_call.1} parent=1 // pred_fallthru
      _
    // Predicated region
    $region26: #{tpu_custom_call.1} parent=1 // pred_check
      _
    $region27: #{tpu_custom_call.1} parent=1 // pred_check_branch
      %78 = sbr.rel (0) target = $region29
    $region28: #{tpu_custom_call.1} parent=1 // pred_region
      %79 = dma.done [#allocation4], 256
    $region29: #{tpu_custom_call.1} parent=1 // pred_fallthru
      _
    // Predicated region
    $region30: #{tpu_custom_call.1} parent=1 // pred_check
      _
    $region31: #{tpu_custom_call.1} parent=1 // pred_check_branch
      %81 = sbr.rel (0) target = $region33
    $region32: #{tpu_custom_call.1} parent=1 // pred_region
      %82 = dma.done [#allocation7], 2048
    $region33: #{tpu_custom_call.1} parent=1 // pred_fallthru
      _
    // Predicated region
    $region34: #{tpu_custom_call.1} parent=1 // pred_check
      _
    $region35: #{tpu_custom_call.1} parent=1 // pred_check_branch
      %84 = sbr.rel (0) target = $region37
    $region36: #{tpu_custom_call.1} parent=1 // pred_region
      %85 = dma.done [#allocation7], 2048
    $region37: #{tpu_custom_call.1} parent=1 // pred_fallthru
      _
    // Predicated region
    $region38: #{tpu_custom_call.1} parent=1 // pred_check
      _
    $region39: #{tpu_custom_call.1} parent=1 // pred_check_branch
      %87 = sbr.rel (0) target = $region41
    $region40: #{tpu_custom_call.1} parent=1 // pred_region
      %88 = dma.done [#allocation10], 3072
    $region41: #{tpu_custom_call.1} parent=1 // pred_fallthru
      _
    // Predicated region
    $region42: #{tpu_custom_call.1} parent=1 // pred_check
      _
    $region43: #{tpu_custom_call.1} parent=1 // pred_check_branch
      %90 = sbr.rel (0) target = $region45
    $region44: #{tpu_custom_call.1} parent=1 // pred_region
      %91 = dma.done [#allocation10], 1024
    $region45: #{tpu_custom_call.1} parent=1 // pred_fallthru
      _
    %v93 = vld [vmem:[#allocation3] sm:$0xff]
    %v94 = vld [vmem:[#allocation3 + $0x8] sm:$0xff]
    %v95 = vrot.slane %v93, 4
    %v96 = vadd.f32 %v93, %v95
    %v97 = vrot.slane %v96, 2
    %v98 = vadd.f32 %v96, %v97
    %v99 = vrot.slane %v98, 1
    %v100 = vadd.f32 %v98, %v99
    %v101 = vrot.slane %v94, 4
    %v102 = vadd.f32 %v94, %v101
    %v103 = vrot.slane %v102, 2
    %v104 = vadd.f32 %v102, %v103
    %v105 = vrot.slane %v104, 1
    %v106 = vadd.f32 %v104, %v105
    %v107 = vrcp.pop 8.0
    %v108 = vmul.f32 %v100, %v107
    %v109 = vmul.f32 %v106, %v107
    %v110 = vld [vmem:[#allocation6] sm:$0xff]
    %v111 = vld [vmem:[#allocation6 + $0x8] sm:$0xff]
    %v112 = vld [vmem:[#allocation6 + $0x10] sm:$0xff]
    %v113 = vld [vmem:[#allocation6 + $0x18] sm:$0xff]
    %v114 = vld [vmem:[#allocation6 + $0x20] sm:$0xff]
    %v115 = vld [vmem:[#allocation6 + $0x28] sm:$0xff]
    %v116 = vld [vmem:[#allocation6 + $0x30] sm:$0xff]
    %v117 = vld [vmem:[#allocation6 + $0x38] sm:$0xff]
    %v118 = vld [vmem:[#allocation6 + $0x40] sm:$0xff]
    %v119 = vld [vmem:[#allocation6 + $0x48] sm:$0xff]
    %v120 = vld [vmem:[#allocation6 + $0x50] sm:$0xff]
    %v121 = vld [vmem:[#allocation6 + $0x58] sm:$0xff]
    %v122 = vld [vmem:[#allocation6 + $0x60] sm:$0xff]
    %v123 = vld [vmem:[#allocation6 + $0x68] sm:$0xff]
    %v124 = vld [vmem:[#allocation6 + $0x70] sm:$0xff]
    %v125 = vld [vmem:[#allocation6 + $0x78] sm:$0xff]
    %vm128 = vcmask 1041409
    %v129 = vsel %vm128, %v109, %v108
    %131 = vmatprep.subr.mxu0 0.0
    %132 = vmatpush1.msra.mxu0 %v110
    %133 = vmatprep.subr.mxu0 0.0
    %134 = vmatpush1.msra.mxu0 %v111
    %135 = vmatprep.subr.mxu0 0.0
    %136 = vmatpush1.msra.mxu0 %v112
    %137 = vmatprep.subr.mxu0 0.0
    %138 = vmatpush1.msra.mxu0 %v113
    %139 = vmatprep.subr.mxu0 0.0
    %140 = vmatpush1.msra.mxu0 %v114
    %141 = vmatprep.subr.mxu0 0.0
    %142 = vmatpush1.msra.mxu0 %v115
    %143 = vmatprep.subr.mxu0 0.0
    %144 = vmatpush1.msra.mxu0 %v116
    %145 = vmatprep.subr.mxu0 0.0
    %146 = vmatpush1.msra.mxu0 %v117
    %147 = vmatprep.subr.mxu0 0.0
    %148 = vmatpush1.msra.mxu0 %v118
    %149 = vmatprep.subr.mxu0 0.0
    %150 = vmatpush1.msra.mxu0 %v119
    %151 = vmatprep.subr.mxu0 0.0
    %152 = vmatpush1.msra.mxu0 %v120
    %153 = vmatprep.subr.mxu0 0.0
    %154 = vmatpush1.msra.mxu0 %v121
    %155 = vmatprep.subr.mxu0 0.0
    %156 = vmatpush1.msra.mxu0 %v122
    %157 = vmatprep.subr.mxu0 0.0
    %158 = vmatpush1.msra.mxu0 %v123
    %159 = vmatprep.subr.mxu0 0.0
    %160 = vmatpush1.msra.mxu0 %v124
    %161 = vmatprep.subr.mxu0 0.0
    %162 = vmatpush1.msra.mxu0 %v125
    %163 = vmatprep.subr.mxu0 0.0
    %164 = vmatpush1.msra.mxu0 0.0
    %165 = vmatprep.subr.mxu0 0.0
    %166 = vmatpush1.msra.mxu0 0.0
    %167 = vmatprep.subr.mxu0 0.0
    %168 = vmatpush1.msra.mxu0 0.0
    %169 = vmatprep.subr.mxu0 0.0
    %170 = vmatpush1.msra.mxu0 0.0
    %171 = vmatprep.subr.mxu0 0.0
    %172 = vmatpush1.msra.mxu0 0.0
    %173 = vmatprep.subr.mxu0 0.0
    %174 = vmatpush1.msra.mxu0 0.0
    %175 = vmatprep.subr.mxu0 0.0
    %176 = vmatpush1.msra.mxu0 0.0
    %177 = vmatprep.subr.mxu0 0.0
    %178 = vmatpush1.msra.mxu0 0.0
    %179 = vmatprep.subr.mxu0 0.0
    %180 = vmatpush1.msra.mxu0 0.0
    %181 = vmatprep.subr.mxu0 0.0
    %182 = vmatpush1.msra.mxu0 0.0
    %183 = vmatprep.subr.mxu0 0.0
    %184 = vmatpush1.msra.mxu0 0.0
    %185 = vmatprep.subr.mxu0 0.0
    %186 = vmatpush1.msra.mxu0 0.0
    %187 = vmatprep.subr.mxu0 0.0
    %188 = vmatpush1.msra.mxu0 0.0
    %189 = vmatprep.subr.mxu0 0.0
    %190 = vmatpush1.msra.mxu0 0.0
    %191 = vmatprep.subr.mxu0 0.0
    %192 = vmatpush1.msra.mxu0 0.0
    %193 = vmatprep.subr.mxu0 0.0
    %194 = vmatpush1.msra.mxu0 0.0
    %195 = vmatprep.mubr.f32.mxu0 0.0
    %196 = vmatmul.mubr.f32.gmra.mrb[0].mxu0 %v129
    %v197 = vpop.f32.mrb[0].mxu0
    %v198 = vadd.f32 0.0, %v197
    %v199 = vpop.f32.mrb[0].mxu0
    %200 = vdwg.mxu0
    %v201 = vmax.f32 %v198, 0.0
    %v202 = vld [vmem:[#allocation8] sm:$0xff]
    %v203 = vld [vmem:[#allocation8 + $0x8] sm:$0xff]
    %v204 = vld [vmem:[#allocation8 + $0x10] sm:$0xff]
    %v205 = vld [vmem:[#allocation8 + $0x18] sm:$0xff]
    %v206 = vld [vmem:[#allocation8 + $0x20] sm:$0xff]
    %v207 = vld [vmem:[#allocation8 + $0x28] sm:$0xff]
    %v208 = vld [vmem:[#allocation8 + $0x30] sm:$0xff]
    %v209 = vld [vmem:[#allocation8 + $0x38] sm:$0xff]
    %v210 = vld [vmem:[#allocation8 + $0x40] sm:$0xff]
    %v211 = vld [vmem:[#allocation8 + $0x48] sm:$0xff]
    %v212 = vld [vmem:[#allocation8 + $0x50] sm:$0xff]
    %v213 = vld [vmem:[#allocation8 + $0x58] sm:$0xff]
    %v214 = vld [vmem:[#allocation8 + $0x60] sm:$0xff]
    %v215 = vld [vmem:[#allocation8 + $0x68] sm:$0xff]
    %v216 = vld [vmem:[#allocation8 + $0x70] sm:$0xff]
    %v217 = vld [vmem:[#allocation8 + $0x78] sm:$0xff]
    %218 = vmatprep.subr.mxu0 0.0
    %219 = vmatpush1.msra.mxu0 %v202
    %220 = vmatprep.subr.mxu0 0.0
    %221 = vmatpush1.msra.mxu0 %v203
    %222 = vmatprep.subr.mxu0 0.0
    %223 = vmatpush1.msra.mxu0 %v204
    %224 = vmatprep.subr.mxu0 0.0
    %225 = vmatpush1.msra.mxu0 %v205
    %226 = vmatprep.subr.mxu0 0.0
    %227 = vmatpush1.msra.mxu0 %v206
    %228 = vmatprep.subr.mxu0 0.0
    %229 = vmatpush1.msra.mxu0 %v207
    %230 = vmatprep.subr.mxu0 0.0
    %231 = vmatpush1.msra.mxu0 %v208
    %232 = vmatprep.subr.mxu0 0.0
    %233 = vmatpush1.msra.mxu0 %v209
    %234 = vmatprep.subr.mxu0 0.0
    %235 = vmatpush1.msra.mxu0 %v210
    %236 = vmatprep.subr.mxu0 0.0
    %237 = vmatpush1.msra.mxu0 %v211
    %238 = vmatprep.subr.mxu0 0.0
    %239 = vmatpush1.msra.mxu0 %v212
    %240 = vmatprep.subr.mxu0 0.0
    %241 = vmatpush1.msra.mxu0 %v213
    %242 = vmatprep.subr.mxu0 0.0
    %243 = vmatpush1.msra.mxu0 %v214
    %244 = vmatprep.subr.mxu0 0.0
    %245 = vmatpush1.msra.mxu0 %v215
    %246 = vmatprep.subr.mxu0 0.0
    %247 = vmatpush1.msra.mxu0 %v216
    %248 = vmatprep.subr.mxu0 0.0
    %249 = vmatpush1.msra.mxu0 %v217
    %250 = vmatprep.subr.mxu0 0.0
    %251 = vmatpush1.msra.mxu0 0.0
    %252 = vmatprep.subr.mxu0 0.0
    %253 = vmatpush1.msra.mxu0 0.0
    %254 = vmatprep.subr.mxu0 0.0
    %255 = vmatpush1.msra.mxu0 0.0
    %256 = vmatprep.subr.mxu0 0.0
    %257 = vmatpush1.msra.mxu0 0.0
    %258 = vmatprep.subr.mxu0 0.0
    %259 = vmatpush1.msra.mxu0 0.0
    %260 = vmatprep.subr.mxu0 0.0
    %261 = vmatpush1.msra.mxu0 0.0
    %262 = vmatprep.subr.mxu0 0.0
    %263 = vmatpush1.msra.mxu0 0.0
    %264 = vmatprep.subr.mxu0 0.0
    %265 = vmatpush1.msra.mxu0 0.0
    %266 = vmatprep.subr.mxu0 0.0
    %267 = vmatpush1.msra.mxu0 0.0
    %268 = vmatprep.subr.mxu0 0.0
    %269 = vmatpush1.msra.mxu0 0.0
    %270 = vmatprep.subr.mxu0 0.0
    %271 = vmatpush1.msra.mxu0 0.0
    %272 = vmatprep.subr.mxu0 0.0
    %273 = vmatpush1.msra.mxu0 0.0
    %274 = vmatprep.subr.mxu0 0.0
    %275 = vmatpush1.msra.mxu0 0.0
    %276 = vmatprep.subr.mxu0 0.0
    %277 = vmatpush1.msra.mxu0 0.0
    %278 = vmatprep.subr.mxu0 0.0
    %279 = vmatpush1.msra.mxu0 0.0
    %280 = vmatprep.subr.mxu0 0.0
    %281 = vmatpush1.msra.mxu0 0.0
    %282 = vmatprep.mubr.f32.mxu0 0.0
    %283 = vmatmul.mubr.f32.gmra.mrb[0].mxu0 %v201
    %v284 = vpop.f32.mrb[0].mxu0
    %v285 = vadd.f32 0.0, %v284
    %v286 = vpop.f32.mrb[0].mxu0
    %287 = vdwg.mxu0
    %v288 = vxor.u32 %v285, 2147483648
    %v289 = vmul.f32 %v288, 1.442695
    %v290 = vpow.pop %v289
    %v291 = vadd.f32 %v290, 1.0
    %v292 = vrcp.pop %v291
    %v293 = vmul.f32 1.0, %v292
    %v296 = vunpack.c.l.s4 1966171168
    %v297 = vunpack.c.0.s8 %v296
    %v298 = vlaneseq
    %v299 = vshrl.u32 %v298, 7
    %v300 = vsub.s32 %v297, %v299
    %v301 = vrot.slane %v293, %v300
    %v302 = vcombine.high %v301, %v301
    %v304 = vunpack.c.l.s4 1966171168
    %v305 = vunpack.c.0.s8 %v304
    %v306 = vlaneseq
    %v307 = vshrl.u32 %v306, 7
    %v308 = vsub.s32 %v305, %v307
    %v309 = vrot.slane %v301, %v308
    %v311 = vunpack.c.l.s4 1966171168
    %v312 = vunpack.c.0.s8 %v311
    %v313 = vlaneseq
    %v314 = vshrl.u32 %v313, 7
    %v315 = vsub.s32 %v312, %v314
    %v316 = vrot.slane %v302, %v315
    %v317 = vlaneseq
    %v318 = vshrl.u32 %v317, 7
    %v319 = vsub.s32 0, %v318
    %v320 = vrot.slane %v309, %v319
    %v321 = vlaneseq
    %v322 = vshrl.u32 %v321, 7
    %v323 = vsub.s32 0, %v322
    %v324 = vrot.slane %v316, %v323
    %v327 = vmul.f32 %v93, %v320
    %v328 = vmul.f32 %v94, %v324
    %v329 = vpack.c.bf16 %v327, %v327
    %v330 = vpack.c.bf16 %v328, %v328
    %v331 = vld [vmem:[#allocation9] sm:$0xff]
    %v332 = vld [vmem:[#allocation9 + $0x8] sm:$0xf]
    %v333 = vld [vmem:[#allocation9 + $0xc] sm:$0xff]
    %v334 = vld [vmem:[#allocation9 + $0x14] sm:$0xf]
    %v335 = vld [vmem:[#allocation9 + $0x18] sm:$0xff]
    %v336 = vld [vmem:[#allocation9 + $0x20] sm:$0xf]
    %v337 = vld [vmem:[#allocation9 + $0x24] sm:$0xff]
    %v338 = vld [vmem:[#allocation9 + $0x2c] sm:$0xf]
    %v339 = vld [vmem:[#allocation9 + $0x30] sm:$0xff]
    %v340 = vld [vmem:[#allocation9 + $0x38] sm:$0xf]
    %v341 = vld [vmem:[#allocation9 + $0x3c] sm:$0xff]
    %v342 = vld [vmem:[#allocation9 + $0x44] sm:$0xf]
    %v343 = vld [vmem:[#allocation9 + $0x48] sm:$0xff]
    %v344 = vld [vmem:[#allocation9 + $0x50] sm:$0xf]
    %v345 = vld [vmem:[#allocation9 + $0x54] sm:$0xff]
    %v346 = vld [vmem:[#allocation9 + $0x5c] sm:$0xf]
    %v347 = vld [vmem:[#allocation9 + $0x60] sm:$0xff]
    %v348 = vld [vmem:[#allocation9 + $0x68] sm:$0xf]
    %v349 = vld [vmem:[#allocation9 + $0x6c] sm:$0xff]
    %v350 = vld [vmem:[#allocation9 + $0x74] sm:$0xf]
    %v351 = vld [vmem:[#allocation9 + $0x78] sm:$0xff]
    %v352 = vld [vmem:[#allocation9 + $0x80] sm:$0xf]
    %v353 = vld [vmem:[#allocation9 + $0x84] sm:$0xff]
    %v354 = vld [vmem:[#allocation9 + $0x8c] sm:$0xf]
    %v355 = vld [vmem:[#allocation9 + $0x90] sm:$0xff]
    %v356 = vld [vmem:[#allocation9 + $0x98] sm:$0xf]
    %v357 = vld [vmem:[#allocation9 + $0x9c] sm:$0xff]
    %v358 = vld [vmem:[#allocation9 + $0xa4] sm:$0xf]
    %v359 = vld [vmem:[#allocation9 + $0xa8] sm:$0xff]
    %v360 = vld [vmem:[#allocation9 + $0xb0] sm:$0xf]
    %v361 = vld [vmem:[#allocation9 + $0xb4] sm:$0xff]
    %v362 = vld [vmem:[#allocation9 + $0xbc] sm:$0xf]
    %v365 = vunpack.c.l.b16 %v329
    %v366 = vunpack.c.l.b16 %v330
    %v367 = vpack.c.b16 %v366, %v365
    %v401 = vunpack.c.l.b16 %v331
    %v402 = vunpack.c.h.b16 %v331
    %v403 = vunpack.c.l.b16 %v332
    %v404 = vunpack.c.l.b16 %v333
    %v405 = vunpack.c.h.b16 %v333
    %v406 = vunpack.c.l.b16 %v334
    %v407 = vunpack.c.l.b16 %v335
    %v408 = vunpack.c.h.b16 %v335
    %v409 = vunpack.c.l.b16 %v336
    %v410 = vunpack.c.l.b16 %v337
    %v411 = vunpack.c.h.b16 %v337
    %v412 = vunpack.c.l.b16 %v338
    %v413 = vunpack.c.l.b16 %v339
    %v414 = vunpack.c.h.b16 %v339
    %v415 = vunpack.c.l.b16 %v340
    %v416 = vunpack.c.l.b16 %v341
    %v417 = vunpack.c.h.b16 %v341
    %v418 = vunpack.c.l.b16 %v342
    %v419 = vunpack.c.l.b16 %v343
    %v420 = vunpack.c.h.b16 %v343
    %v421 = vunpack.c.l.b16 %v344
    %v422 = vunpack.c.l.b16 %v345
    %v423 = vunpack.c.h.b16 %v345
    %v424 = vunpack.c.l.b16 %v346
    %v425 = vunpack.c.l.b16 %v347
    %v426 = vunpack.c.h.b16 %v347
    %v427 = vunpack.c.l.b16 %v348
    %v428 = vunpack.c.l.b16 %v349
    %v429 = vunpack.c.h.b16 %v349
    %v430 = vunpack.c.l.b16 %v350
    %v431 = vunpack.c.l.b16 %v351
    %v432 = vunpack.c.h.b16 %v351
    %v433 = vunpack.c.l.b16 %v352
    %v434 = vunpack.c.l.b16 %v353
    %v435 = vunpack.c.h.b16 %v353
    %v436 = vunpack.c.l.b16 %v354
    %v437 = vunpack.c.l.b16 %v355
    %v438 = vunpack.c.h.b16 %v355
    %v439 = vunpack.c.l.b16 %v356
    %v440 = vunpack.c.l.b16 %v357
    %v441 = vunpack.c.h.b16 %v357
    %v442 = vunpack.c.l.b16 %v358
    %v443 = vunpack.c.l.b16 %v359
    %v444 = vunpack.c.h.b16 %v359
    %v445 = vunpack.c.l.b16 %v360
    %v446 = vunpack.c.l.b16 %v361
    %v447 = vunpack.c.h.b16 %v361
    %v448 = vunpack.c.l.b16 %v362
    %v449 = vpack.c.b16 %v404, %v401
    %v450 = vpack.c.b16 %v405, %v402
    %v451 = vpack.c.b16 %v406, %v403
    %v452 = vpack.c.b16 %v410, %v407
    %v453 = vpack.c.b16 %v411, %v408
    %v454 = vpack.c.b16 %v412, %v409
    %v455 = vpack.c.b16 %v416, %v413
    %v456 = vpack.c.b16 %v417, %v414
    %v457 = vpack.c.b16 %v418, %v415
    %v458 = vpack.c.b16 %v422, %v419
    %v459 = vpack.c.b16 %v423, %v420
    %v460 = vpack.c.b16 %v424, %v421
    %v461 = vpack.c.b16 %v428, %v425
    %v462 = vpack.c.b16 %v429, %v426
    %v463 = vpack.c.b16 %v430, %v427
    %v464 = vpack.c.b16 %v434, %v431
    %v465 = vpack.c.b16 %v435, %v432
    %v466 = vpack.c.b16 %v436, %v433
    %v467 = vpack.c.b16 %v440, %v437
    %v468 = vpack.c.b16 %v441, %v438
    %v469 = vpack.c.b16 %v442, %v439
    %v470 = vpack.c.b16 %v446, %v443
    %v471 = vpack.c.b16 %v447, %v444
    %v472 = vpack.c.b16 %v448, %v445
    %497 = vmatprep.subr.bf16.mxu0 %v450
    %498 = vmatpush1.bf16.msra.mxu0 %v449
    %499 = vmatprep.subr.bf16.mxu0 %v453
    %500 = vmatpush1.bf16.msra.mxu0 %v452
    %501 = vmatprep.subr.bf16.mxu0 %v456
    %502 = vmatpush1.bf16.msra.mxu0 %v455
    %503 = vmatprep.subr.bf16.mxu0 %v459
    %504 = vmatpush1.bf16.msra.mxu0 %v458
    %505 = vmatprep.subr.bf16.mxu0 %v462
    %506 = vmatpush1.bf16.msra.mxu0 %v461
    %507 = vmatprep.subr.bf16.mxu0 %v465
    %508 = vmatpush1.bf16.msra.mxu0 %v464
    %509 = vmatprep.subr.bf16.mxu0 %v468
    %510 = vmatpush1.bf16.msra.mxu0 %v467
    %511 = vmatprep.subr.bf16.mxu0 %v471
    %512 = vmatpush1.bf16.msra.mxu0 %v470
    %513 = vmatprep.subr.bf16.mxu0 0
    %514 = vmatpush1.bf16.msra.mxu0 0
    %515 = vmatprep.subr.bf16.mxu0 0
    %516 = vmatpush1.bf16.msra.mxu0 0
    %517 = vmatprep.subr.bf16.mxu0 0
    %518 = vmatpush1.bf16.msra.mxu0 0
    %519 = vmatprep.subr.bf16.mxu0 0
    %520 = vmatpush1.bf16.msra.mxu0 0
    %521 = vmatprep.subr.bf16.mxu0 0
    %522 = vmatpush1.bf16.msra.mxu0 0
    %523 = vmatprep.subr.bf16.mxu0 0
    %524 = vmatpush1.bf16.msra.mxu0 0
    %525 = vmatprep.subr.bf16.mxu0 0
    %526 = vmatpush1.bf16.msra.mxu0 0
    %527 = vmatprep.subr.bf16.mxu0 0
    %528 = vmatpush1.bf16.msra.mxu0 0
    %529 = vmatprep.mubr.bf16.mxu0 0
    %530 = vmatmul.mubr.bf16.gmra.mrb[0].mxu0 %v367
    %v531 = vpop.f32.mrb[0].mxu0
    %v532 = vadd.f32 0.0, %v531
    %v533 = vpop.f32.mrb[0].mxu0
    %v534 = vadd.f32 0.0, %v533
    %v535 = vpop.f32.mrb[0].mxu0
    %v536 = vadd.f32 0.0, %v535
    %v537 = vpop.f32.mrb[0].mxu0
    %v538 = vadd.f32 0.0, %v537
    %539 = vdwg.mxu0
    %540 = vmatprep.subr.bf16.mxu0 0
    %541 = vmatpush1.bf16.msra.mxu0 %v451
    %542 = vmatprep.subr.bf16.mxu0 0
    %543 = vmatpush1.bf16.msra.mxu0 %v454
    %544 = vmatprep.subr.bf16.mxu0 0
    %545 = vmatpush1.bf16.msra.mxu0 %v457
    %546 = vmatprep.subr.bf16.mxu0 0
    %547 = vmatpush1.bf16.msra.mxu0 %v460
    %548 = vmatprep.subr.bf16.mxu0 0
    %549 = vmatpush1.bf16.msra.mxu0 %v463
    %550 = vmatprep.subr.bf16.mxu0 0
    %551 = vmatpush1.bf16.msra.mxu0 %v466
    %552 = vmatprep.subr.bf16.mxu0 0
    %553 = vmatpush1.bf16.msra.mxu0 %v469
    %554 = vmatprep.subr.bf16.mxu0 0
    %555 = vmatpush1.bf16.msra.mxu0 %v472
    %556 = vmatprep.subr.bf16.mxu0 0
    %557 = vmatpush1.bf16.msra.mxu0 0
    %558 = vmatprep.subr.bf16.mxu0 0
    %559 = vmatpush1.bf16.msra.mxu0 0
    %560 = vmatprep.subr.bf16.mxu0 0
    %561 = vmatpush1.bf16.msra.mxu0 0
    %562 = vmatprep.subr.bf16.mxu0 0
    %563 = vmatpush1.bf16.msra.mxu0 0
    %564 = vmatprep.subr.bf16.mxu0 0
    %565 = vmatpush1.bf16.msra.mxu0 0
    %566 = vmatprep.subr.bf16.mxu0 0
    %567 = vmatpush1.bf16.msra.mxu0 0
    %568 = vmatprep.subr.bf16.mxu0 0
    %569 = vmatpush1.bf16.msra.mxu0 0
    %570 = vmatprep.subr.bf16.mxu0 0
    %571 = vmatpush1.bf16.msra.mxu0 0
    %572 = vmatprep.mubr.bf16.mxu0 0
    %573 = vmatmul.mubr.bf16.gmra.mrb[0].mxu0 %v367
    %v574 = vpop.f32.mrb[0].mxu0
    %v575 = vadd.f32 0.0, %v574
    %v576 = vpop.f32.mrb[0].mxu0
    %v577 = vpop.f32.mrb[0].mxu0
    %v578 = vadd.f32 0.0, %v577
    %v579 = vpop.f32.mrb[0].mxu0
    %580 = vdwg.mxu0
    %v581 = vpack.c.bf16 %v536, %v532
    %v582 = vpack.c.bf16 %v538, %v534
    %v583 = vpack.c.bf16 %v578, %v575
    %vm584 = vcmask 523264
    %v586 = vsel %vm584, %v581, 0
    %v589 = vsel %vm584, %v582, 0
    %591 = vmatprep.subr.bf16.mxu0 0
    %592 = vmatpush1.bf16.xpose.msra.mxu0 %v589
    %593 = vmatprep.subr.bf16.mxu0 0
    %594 = vmatpush1.bf16.xpose.msra.mxu0 0
    %595 = vmatprep.subr.bf16.mxu0 0
    %596 = vmatpush1.bf16.xpose.msra.mxu0 0
    %597 = vmatprep.subr.bf16.mxu0 0
    %598 = vmatpush1.bf16.xpose.msra.mxu0 0
    %599 = vmatprep.subr.bf16.mxu0 0
    %600 = vmatpush1.bf16.xpose.msra.mxu0 0
    %601 = vmatprep.subr.bf16.mxu0 0
    %602 = vmatpush1.bf16.xpose.msra.mxu0 0
    %603 = vmatprep.subr.bf16.mxu0 0
    %604 = vmatpush1.bf16.xpose.msra.mxu0 0
    %605 = vmatprep.subr.bf16.mxu0 0
    %606 = vmatpush1.bf16.xpose.msra.mxu0 0
    %607 = vmatprep.subr.bf16.mxu0 0
    %608 = vmatpush1.bf16.xpose.msra.mxu0 0
    %609 = vmatprep.subr.bf16.mxu0 0
    %610 = vmatpush1.bf16.xpose.msra.mxu0 0
    %611 = vmatprep.subr.bf16.mxu0 0
    %612 = vmatpush1.bf16.xpose.msra.mxu0 0
    %613 = vmatprep.subr.bf16.mxu0 0
    %614 = vmatpush1.bf16.xpose.msra.mxu0 0
    %615 = vmatprep.subr.bf16.mxu0 0
    %616 = vmatpush1.bf16.xpose.msra.mxu0 0
    %617 = vmatprep.subr.bf16.mxu0 0
    %618 = vmatpush1.bf16.xpose.msra.mxu0 0
    %619 = vmatprep.subr.bf16.mxu0 0
    %620 = vmatpush1.bf16.xpose.msra.mxu0 0
    %621 = vmatprep.subr.bf16.mxu0 0
    %622 = vmatpush1.bf16.xpose.msra.mxu0 0
    %623 = vmatprep.mubr.bf16.mxu0 0
    %624 = vmatmul.mubr.bf16.gmra.mrb[0].mxu0 %v586
    %v625 = vpop.f32.mrb[0].mxu0
    %v626 = vadd.f32 0.0, %v625
    %v627 = vpop.f32.mrb[0].mxu0
    %v628 = vpop.f32.mrb[0].mxu0
    %v629 = vpop.f32.mrb[0].mxu0
    %630 = vdwg.mxu0
    %vm631 = vcmask 64512
    %v632 = vsel %vm631, %v626, -inf
    %633 = vmax.xlane.f32.xlu0 %v632
    %v634 = vpop.xlane.xlu0 %633
    %v635 = vsub.f32 %v626, %v634
    %v636 = vmul.f32 %v635, 1.442695
    %v637 = vpow.pop %v636
    %v638 = vsel %vm631, %v637, 0.0
    %639 = vadd.xlane.f32.xlu0 %v638
    %v640 = vpop.xlane.xlu0 %639
    %v641 = vpack.c.bf16 %v637, %v637
    %v643 = vsel %vm631, %v641, 0
    %vm645 = vcmask 1043456
    %v647 = vsel %vm645, %v583, 0
    %649 = vmatprep.subr.bf16.mxu0 0
    %650 = vmatpush1.bf16.msra.mxu0 %v647
    %651 = vmatprep.subr.bf16.mxu0 0
    %652 = vmatpush1.bf16.msra.mxu0 0
    %653 = vmatprep.subr.bf16.mxu0 0
    %654 = vmatpush1.bf16.msra.mxu0 0
    %655 = vmatprep.subr.bf16.mxu0 0
    %656 = vmatpush1.bf16.msra.mxu0 0
    %657 = vmatprep.subr.bf16.mxu0 0
    %658 = vmatpush1.bf16.msra.mxu0 0
    %659 = vmatprep.subr.bf16.mxu0 0
    %660 = vmatpush1.bf16.msra.mxu0 0
    %661 = vmatprep.subr.bf16.mxu0 0
    %662 = vmatpush1.bf16.msra.mxu0 0
    %663 = vmatprep.subr.bf16.mxu0 0
    %664 = vmatpush1.bf16.msra.mxu0 0
    %665 = vmatprep.subr.bf16.mxu0 0
    %666 = vmatpush1.bf16.msra.mxu0 0
    %667 = vmatprep.subr.bf16.mxu0 0
    %668 = vmatpush1.bf16.msra.mxu0 0
    %669 = vmatprep.subr.bf16.mxu0 0
    %670 = vmatpush1.bf16.msra.mxu0 0
    %671 = vmatprep.subr.bf16.mxu0 0
    %672 = vmatpush1.bf16.msra.mxu0 0
    %673 = vmatprep.subr.bf16.mxu0 0
    %674 = vmatpush1.bf16.msra.mxu0 0
    %675 = vmatprep.subr.bf16.mxu0 0
    %676 = vmatpush1.bf16.msra.mxu0 0
    %677 = vmatprep.subr.bf16.mxu0 0
    %678 = vmatpush1.bf16.msra.mxu0 0
    %679 = vmatprep.subr.bf16.mxu0 0
    %680 = vmatpush1.bf16.msra.mxu0 0
    %681 = vmatprep.mubr.bf16.mxu0 0
    %682 = vmatmul.mubr.bf16.gmra.mrb[0].mxu0 %v643
    %v683 = vpop.f32.mrb[0].mxu0
    %v684 = vadd.f32 0.0, %v683
    %v685 = vpop.f32.mrb[0].mxu0
    %v686 = vpop.f32.mrb[0].mxu0
    %v687 = vpop.f32.mrb[0].mxu0
    %688 = vdwg.mxu0
    %v689 = vrcp.pop %v640
    %v690 = vmul.f32 %v684, %v689
    %v691 = vpack.c.bf16 %v690, %v690
    %vm692 = vcmask 519168
    %693 = vst.msk [vmem:[#allocation2] sm:$0xf] %vm692, %v691
    %695 = vrot.lane.b32.xlu0 %v581, 64
    %v696 = vpop.permute.xlu0 %695
    %698 = vrot.lane.b32.xlu0 %v582, 64
    %v699 = vpop.permute.xlu0 %698
    %v701 = vsel %vm584, %v696, 0
    %v704 = vsel %vm584, %v699, 0
    %706 = vmatprep.subr.bf16.mxu0 0
    %707 = vmatpush1.bf16.xpose.msra.mxu0 %v704
    %708 = vmatprep.subr.bf16.mxu0 0
    %709 = vmatpush1.bf16.xpose.msra.mxu0 0
    %710 = vmatprep.subr.bf16.mxu0 0
    %711 = vmatpush1.bf16.xpose.msra.mxu0 0
    %712 = vmatprep.subr.bf16.mxu0 0
    %713 = vmatpush1.bf16.xpose.msra.mxu0 0
    %714 = vmatprep.subr.bf16.mxu0 0
    %715 = vmatpush1.bf16.xpose.msra.mxu0 0
    %716 = vmatprep.subr.bf16.mxu0 0
    %717 = vmatpush1.bf16.xpose.msra.mxu0 0
    %718 = vmatprep.subr.bf16.mxu0 0
    %719 = vmatpush1.bf16.xpose.msra.mxu0 0
    %720 = vmatprep.subr.bf16.mxu0 0
    %721 = vmatpush1.bf16.xpose.msra.mxu0 0
    %722 = vmatprep.subr.bf16.mxu0 0
    %723 = vmatpush1.bf16.xpose.msra.mxu0 0
    %724 = vmatprep.subr.bf16.mxu0 0
    %725 = vmatpush1.bf16.xpose.msra.mxu0 0
    %726 = vmatprep.subr.bf16.mxu0 0
    %727 = vmatpush1.bf16.xpose.msra.mxu0 0
    %728 = vmatprep.subr.bf16.mxu0 0
    %729 = vmatpush1.bf16.xpose.msra.mxu0 0
    %730 = vmatprep.subr.bf16.mxu0 0
    %731 = vmatpush1.bf16.xpose.msra.mxu0 0
    %732 = vmatprep.subr.bf16.mxu0 0
    %733 = vmatpush1.bf16.xpose.msra.mxu0 0
    %734 = vmatprep.subr.bf16.mxu0 0
    %735 = vmatpush1.bf16.xpose.msra.mxu0 0
    %736 = vmatprep.subr.bf16.mxu0 0
    %737 = vmatpush1.bf16.xpose.msra.mxu0 0
    %738 = vmatprep.mubr.bf16.mxu0 0
    %739 = vmatmul.mubr.bf16.gmra.mrb[0].mxu0 %v701
    %v740 = vpop.f32.mrb[0].mxu0
    %v741 = vadd.f32 0.0, %v740
    %v742 = vpop.f32.mrb[0].mxu0
    %v743 = vpop.f32.mrb[0].mxu0
    %v744 = vpop.f32.mrb[0].mxu0
    %745 = vdwg.mxu0
    %v746 = vsel %vm631, %v741, -inf
    %747 = vmax.xlane.f32.xlu0 %v746
    %v748 = vpop.xlane.xlu0 %747
    %v749 = vsub.f32 %v741, %v748
    %v750 = vmul.f32 %v749, 1.442695
    %v751 = vpow.pop %v750
    %v752 = vsel %vm631, %v751, 0.0
    %753 = vadd.xlane.f32.xlu0 %v752
    %v754 = vpop.xlane.xlu0 %753
    %v755 = vpack.c.bf16 %v751, %v751
    %757 = vrot.lane.b32.xlu0 %v583, 64
    %v758 = vpop.permute.xlu0 %757
    %v760 = vsel %vm631, %v755, 0
    %v763 = vsel %vm645, %v758, 0
    %765 = vmatprep.subr.bf16.mxu0 0
    %766 = vmatpush1.bf16.msra.mxu0 %v763
    %767 = vmatprep.subr.bf16.mxu0 0
    %768 = vmatpush1.bf16.msra.mxu0 0
    %769 = vmatprep.subr.bf16.mxu0 0
    %770 = vmatpush1.bf16.msra.mxu0 0
    %771 = vmatprep.subr.bf16.mxu0 0
    %772 = vmatpush1.bf16.msra.mxu0 0
    %773 = vmatprep.subr.bf16.mxu0 0
    %774 = vmatpush1.bf16.msra.mxu0 0
    %775 = vmatprep.subr.bf16.mxu0 0
    %776 = vmatpush1.bf16.msra.mxu0 0
    %777 = vmatprep.subr.bf16.mxu0 0
    %778 = vmatpush1.bf16.msra.mxu0 0
    %779 = vmatprep.subr.bf16.mxu0 0
    %780 = vmatpush1.bf16.msra.mxu0 0
    %781 = vmatprep.subr.bf16.mxu0 0
    %782 = vmatpush1.bf16.msra.mxu0 0
    %783 = vmatprep.subr.bf16.mxu0 0
    %784 = vmatpush1.bf16.msra.mxu0 0
    %785 = vmatprep.subr.bf16.mxu0 0
    %786 = vmatpush1.bf16.msra.mxu0 0
    %787 = vmatprep.subr.bf16.mxu0 0
    %788 = vmatpush1.bf16.msra.mxu0 0
    %789 = vmatprep.subr.bf16.mxu0 0
    %790 = vmatpush1.bf16.msra.mxu0 0
    %791 = vmatprep.subr.bf16.mxu0 0
    %792 = vmatpush1.bf16.msra.mxu0 0
    %793 = vmatprep.subr.bf16.mxu0 0
    %794 = vmatpush1.bf16.msra.mxu0 0
    %795 = vmatprep.subr.bf16.mxu0 0
    %796 = vmatpush1.bf16.msra.mxu0 0
    %797 = vmatprep.mubr.bf16.mxu0 0
    %798 = vmatmul.mubr.bf16.gmra.mrb[0].mxu0 %v760
    %v799 = vpop.f32.mrb[0].mxu0
    %v800 = vadd.f32 0.0, %v799
    %v801 = vpop.f32.mrb[0].mxu0
    %v802 = vpop.f32.mrb[0].mxu0
    %v803 = vpop.f32.mrb[0].mxu0
    %804 = vdwg.mxu0
    %v805 = vrcp.pop %v754
    %v806 = vmul.f32 %v800, %v805
    %v807 = vpack.c.bf16 %v806, %v806
    %v809 = vunpack.c.l.b16 %v807
    %v810 = vpack.c.b16 %v809, %v809
    %811 = vrot.lane.b32.xlu0 %v810, 64
    %v812 = vpop.permute.xlu0 %811
    %vm814 = vcmask 1043968
    %815 = vst.msk [vmem:[#allocation2] sm:$0xf] %vm814, %v812
    %v816 = vrot.slane %v581, 4
    %v817 = vrot.slane %v582, 4
    %v819 = vsel %vm584, %v816, 0
    %v822 = vsel %vm584, %v817, 0
    %824 = vmatprep.subr.bf16.mxu0 0
    %825 = vmatpush1.bf16.xpose.msra.mxu0 %v822
    %826 = vmatprep.subr.bf16.mxu0 0
    %827 = vmatpush1.bf16.xpose.msra.mxu0 0
    %828 = vmatprep.subr.bf16.mxu0 0
    %829 = vmatpush1.bf16.xpose.msra.mxu0 0
    %830 = vmatprep.subr.bf16.mxu0 0
    %831 = vmatpush1.bf16.xpose.msra.mxu0 0
    %832 = vmatprep.subr.bf16.mxu0 0
    %833 = vmatpush1.bf16.xpose.msra.mxu0 0
    %834 = vmatprep.subr.bf16.mxu0 0
    %835 = vmatpush1.bf16.xpose.msra.mxu0 0
    %836 = vmatprep.subr.bf16.mxu0 0
    %837 = vmatpush1.bf16.xpose.msra.mxu0 0
    %838 = vmatprep.subr.bf16.mxu0 0
    %839 = vmatpush1.bf16.xpose.msra.mxu0 0
    %840 = vmatprep.subr.bf16.mxu0 0
    %841 = vmatpush1.bf16.xpose.msra.mxu0 0
    %842 = vmatprep.subr.bf16.mxu0 0
    %843 = vmatpush1.bf16.xpose.msra.mxu0 0
    %844 = vmatprep.subr.bf16.mxu0 0
    %845 = vmatpush1.bf16.xpose.msra.mxu0 0
    %846 = vmatprep.subr.bf16.mxu0 0
    %847 = vmatpush1.bf16.xpose.msra.mxu0 0
    %848 = vmatprep.subr.bf16.mxu0 0
    %849 = vmatpush1.bf16.xpose.msra.mxu0 0
    %850 = vmatprep.subr.bf16.mxu0 0
    %851 = vmatpush1.bf16.xpose.msra.mxu0 0
    %852 = vmatprep.subr.bf16.mxu0 0
    %853 = vmatpush1.bf16.xpose.msra.mxu0 0
    %854 = vmatprep.subr.bf16.mxu0 0
    %855 = vmatpush1.bf16.xpose.msra.mxu0 0
    %856 = vmatprep.mubr.bf16.mxu0 0
    %857 = vmatmul.mubr.bf16.gmra.mrb[0].mxu0 %v819
    %v858 = vpop.f32.mrb[0].mxu0
    %v859 = vadd.f32 0.0, %v858
    %v860 = vpop.f32.mrb[0].mxu0
    %v861 = vpop.f32.mrb[0].mxu0
    %v862 = vpop.f32.mrb[0].mxu0
    %863 = vdwg.mxu0
    %v864 = vsel %vm631, %v859, -inf
    %865 = vmax.xlane.f32.xlu0 %v864
    %v866 = vpop.xlane.xlu0 %865
    %v867 = vsub.f32 %v859, %v866
    %v868 = vmul.f32 %v867, 1.442695
    %v869 = vpow.pop %v868
    %v870 = vsel %vm631, %v869, 0.0
    %871 = vadd.xlane.f32.xlu0 %v870
    %v872 = vpop.xlane.xlu0 %871
    %v873 = vpack.c.bf16 %v869, %v869
    %v874 = vrot.slane %v583, 4
    %v876 = vsel %vm631, %v873, 0
    %v879 = vsel %vm645, %v874, 0
    %881 = vmatprep.subr.bf16.mxu0 0
    %882 = vmatpush1.bf16.msra.mxu0 %v879
    %883 = vmatprep.subr.bf16.mxu0 0
    %884 = vmatpush1.bf16.msra.mxu0 0
    %885 = vmatprep.subr.bf16.mxu0 0
    %886 = vmatpush1.bf16.msra.mxu0 0
    %887 = vmatprep.subr.bf16.mxu0 0
    %888 = vmatpush1.bf16.msra.mxu0 0
    %889 = vmatprep.subr.bf16.mxu0 0
    %890 = vmatpush1.bf16.msra.mxu0 0
    %891 = vmatprep.subr.bf16.mxu0 0
    %892 = vmatpush1.bf16.msra.mxu0 0
    %893 = vmatprep.subr.bf16.mxu0 0
    %894 = vmatpush1.bf16.msra.mxu0 0
    %895 = vmatprep.subr.bf16.mxu0 0
    %896 = vmatpush1.bf16.msra.mxu0 0
    %897 = vmatprep.subr.bf16.mxu0 0
    %898 = vmatpush1.bf16.msra.mxu0 0
    %899 = vmatprep.subr.bf16.mxu0 0
    %900 = vmatpush1.bf16.msra.mxu0 0
    %901 = vmatprep.subr.bf16.mxu0 0
    %902 = vmatpush1.bf16.msra.mxu0 0
    %903 = vmatprep.subr.bf16.mxu0 0
    %904 = vmatpush1.bf16.msra.mxu0 0
    %905 = vmatprep.subr.bf16.mxu0 0
    %906 = vmatpush1.bf16.msra.mxu0 0
    %907 = vmatprep.subr.bf16.mxu0 0
    %908 = vmatpush1.bf16.msra.mxu0 0
    %909 = vmatprep.subr.bf16.mxu0 0
    %910 = vmatpush1.bf16.msra.mxu0 0
    %911 = vmatprep.subr.bf16.mxu0 0
    %912 = vmatpush1.bf16.msra.mxu0 0
    %913 = vmatprep.mubr.bf16.mxu0 0
    %914 = vmatmul.mubr.bf16.gmra.mrb[0].mxu0 %v876
    %v915 = vpop.f32.mrb[0].mxu0
    %v916 = vadd.f32 0.0, %v915
    %v917 = vpop.f32.mrb[0].mxu0
    %v918 = vpop.f32.mrb[0].mxu0
    %v919 = vpop.f32.mrb[0].mxu0
    %920 = vdwg.mxu0
    %v921 = vrcp.pop %v872
    %v922 = vmul.f32 %v916, %v921
    %v923 = vpack.c.bf16 %v922, %v922
    %s924 = scalar_lea.vmem [#allocation2], 4
    %925 = vst.msk [vmem:[%s924] sm:$0xf] %vm692, %v923
    %926 = vrot.lane.b32.xlu0 %v816, 64
    %v927 = vpop.permute.xlu0 %926
    %928 = vrot.lane.b32.xlu0 %v817, 64
    %v929 = vpop.permute.xlu0 %928
    %v931 = vsel %vm584, %v927, 0
    %v934 = vsel %vm584, %v929, 0
    %936 = vmatprep.subr.bf16.mxu0 0
    %937 = vmatpush1.bf16.xpose.msra.mxu0 %v934
    %938 = vmatprep.subr.bf16.mxu0 0
    %939 = vmatpush1.bf16.xpose.msra.mxu0 0
    %940 = vmatprep.subr.bf16.mxu0 0
    %941 = vmatpush1.bf16.xpose.msra.mxu0 0
    %942 = vmatprep.subr.bf16.mxu0 0
    %943 = vmatpush1.bf16.xpose.msra.mxu0 0
    %944 = vmatprep.subr.bf16.mxu0 0
    %945 = vmatpush1.bf16.xpose.msra.mxu0 0
    %946 = vmatprep.subr.bf16.mxu0 0
    %947 = vmatpush1.bf16.xpose.msra.mxu0 0
    %948 = vmatprep.subr.bf16.mxu0 0
    %949 = vmatpush1.bf16.xpose.msra.mxu0 0
    %950 = vmatprep.subr.bf16.mxu0 0
    %951 = vmatpush1.bf16.xpose.msra.mxu0 0
    %952 = vmatprep.subr.bf16.mxu0 0
    %953 = vmatpush1.bf16.xpose.msra.mxu0 0
    %954 = vmatprep.subr.bf16.mxu0 0
    %955 = vmatpush1.bf16.xpose.msra.mxu0 0
    %956 = vmatprep.subr.bf16.mxu0 0
    %957 = vmatpush1.bf16.xpose.msra.mxu0 0
    %958 = vmatprep.subr.bf16.mxu0 0
    %959 = vmatpush1.bf16.xpose.msra.mxu0 0
    %960 = vmatprep.subr.bf16.mxu0 0
    %961 = vmatpush1.bf16.xpose.msra.mxu0 0
    %962 = vmatprep.subr.bf16.mxu0 0
    %963 = vmatpush1.bf16.xpose.msra.mxu0 0
    %964 = vmatprep.subr.bf16.mxu0 0
    %965 = vmatpush1.bf16.xpose.msra.mxu0 0
    %966 = vmatprep.subr.bf16.mxu0 0
    %967 = vmatpush1.bf16.xpose.msra.mxu0 0
    %968 = vmatprep.mubr.bf16.mxu0 0
    %969 = vmatmul.mubr.bf16.gmra.mrb[0].mxu0 %v931
    %v970 = vpop.f32.mrb[0].mxu0
    %v971 = vadd.f32 0.0, %v970
    %v972 = vpop.f32.mrb[0].mxu0
    %v973 = vpop.f32.mrb[0].mxu0
    %v974 = vpop.f32.mrb[0].mxu0
    %975 = vdwg.mxu0
    %v976 = vsel %vm631, %v971, -inf
    %977 = vmax.xlane.f32.xlu0 %v976
    %v978 = vpop.xlane.xlu0 %977
    %v979 = vsub.f32 %v971, %v978
    %v980 = vmul.f32 %v979, 1.442695
    %v981 = vpow.pop %v980
    %v982 = vsel %vm631, %v981, 0.0
    %983 = vadd.xlane.f32.xlu0 %v982
    %v984 = vpop.xlane.xlu0 %983
    %v985 = vpack.c.bf16 %v981, %v981
    %986 = vrot.lane.b32.xlu0 %v874, 64
    %v987 = vpop.permute.xlu0 %986
    %v989 = vsel %vm631, %v985, 0
    %v992 = vsel %vm645, %v987, 0
    %994 = vmatprep.subr.bf16.mxu0 0
    %995 = vmatpush1.bf16.msra.mxu0 %v992
    %996 = vmatprep.subr.bf16.mxu0 0
    %997 = vmatpush1.bf16.msra.mxu0 0
    %998 = vmatprep.subr.bf16.mxu0 0
    %999 = vmatpush1.bf16.msra.mxu0 0
    %1000 = vmatprep.subr.bf16.mxu0 0
    %1001 = vmatpush1.bf16.msra.mxu0 0
    %1002 = vmatprep.subr.bf16.mxu0 0
    %1003 = vmatpush1.bf16.msra.mxu0 0
    %1004 = vmatprep.subr.bf16.mxu0 0
    %1005 = vmatpush1.bf16.msra.mxu0 0
    %1006 = vmatprep.subr.bf16.mxu0 0
    %1007 = vmatpush1.bf16.msra.mxu0 0
    %1008 = vmatprep.subr.bf16.mxu0 0
    %1009 = vmatpush1.bf16.msra.mxu0 0
    %1010 = vmatprep.subr.bf16.mxu0 0
    %1011 = vmatpush1.bf16.msra.mxu0 0
    %1012 = vmatprep.subr.bf16.mxu0 0
    %1013 = vmatpush1.bf16.msra.mxu0 0
    %1014 = vmatprep.subr.bf16.mxu0 0
    %1015 = vmatpush1.bf16.msra.mxu0 0
    %1016 = vmatprep.subr.bf16.mxu0 0
    %1017 = vmatpush1.bf16.msra.mxu0 0
    %1018 = vmatprep.subr.bf16.mxu0 0
    %1019 = vmatpush1.bf16.msra.mxu0 0
    %1020 = vmatprep.subr.bf16.mxu0 0
    %1021 = vmatpush1.bf16.msra.mxu0 0
    %1022 = vmatprep.subr.bf16.mxu0 0
    %1023 = vmatpush1.bf16.msra.mxu0 0
    %1024 = vmatprep.subr.bf16.mxu0 0
    %1025 = vmatpush1.bf16.msra.mxu0 0
    %1026 = vmatprep.mubr.bf16.mxu0 0
    %1027 = vmatmul.mubr.bf16.gmra.mrb[0].mxu0 %v989
    %v1028 = vpop.f32.mrb[0].mxu0
    %v1029 = vadd.f32 0.0, %v1028
    %v1030 = vpop.f32.mrb[0].mxu0
    %v1031 = vpop.f32.mrb[0].mxu0
    %v1032 = vpop.f32.mrb[0].mxu0
    %1033 = vdwg.mxu0
    %v1034 = vrcp.pop %v984
    %v1035 = vmul.f32 %v1029, %v1034
    %v1036 = vpack.c.bf16 %v1035, %v1035
    %v1038 = vunpack.c.l.b16 %v1036
    %v1039 = vpack.c.b16 %v1038, %v1038
    %1040 = vrot.lane.b32.xlu0 %v1039, 64
    %v1041 = vpop.permute.xlu0 %1040
    %1043 = vst.msk [vmem:[%s924] sm:$0xf] %vm814, %v1041
    %v1044 = vld [vmem:[#allocation2] sm:$0xf]
    %v1045 = vld [vmem:[#allocation2 + $0x4] sm:$0xf]
    %v1046 = vld [vmem:[#allocation11] sm:$0xf]
    %v1047 = vld [vmem:[#allocation11 + $0x4] sm:$0xf]
    %v1048 = vld [vmem:[#allocation11 + $0x8] sm:$0xf]
    %v1049 = vld [vmem:[#allocation11 + $0xc] sm:$0xf]
    %v1050 = vld [vmem:[#allocation11 + $0x10] sm:$0xf]
    %v1051 = vld [vmem:[#allocation11 + $0x14] sm:$0xf]
    %v1052 = vld [vmem:[#allocation11 + $0x18] sm:$0xf]
    %v1053 = vld [vmem:[#allocation11 + $0x1c] sm:$0xf]
    %v1054 = vld [vmem:[#allocation11 + $0x20] sm:$0xf]
    %v1055 = vld [vmem:[#allocation11 + $0x24] sm:$0xf]
    %v1056 = vld [vmem:[#allocation11 + $0x28] sm:$0xf]
    %v1057 = vld [vmem:[#allocation11 + $0x2c] sm:$0xf]
    %v1058 = vld [vmem:[#allocation11 + $0x30] sm:$0xf]
    %v1059 = vld [vmem:[#allocation11 + $0x34] sm:$0xf]
    %v1060 = vld [vmem:[#allocation11 + $0x38] sm:$0xf]
    %v1061 = vld [vmem:[#allocation11 + $0x3c] sm:$0xf]
    %v1062 = vld [vmem:[%s5] sm:$0x1]
    %v1064 = vlaneseq
    %v1065 = vshrl.u32 %v1064, 7
    %v1066 = vsub.s32 0, %v1065
    %v1067 = vrot.slane %v1062, %v1066
    %v1071 = vunpack.c.l.b16 %v1044
    %v1072 = vunpack.c.l.b16 %v1045
    %v1073 = vpack.c.b16 %v1072, %v1071
    %v1091 = vunpack.c.l.b16 %v1046
    %v1092 = vunpack.c.l.b16 %v1047
    %v1093 = vunpack.c.l.b16 %v1048
    %v1094 = vunpack.c.l.b16 %v1049
    %v1095 = vunpack.c.l.b16 %v1050
    %v1096 = vunpack.c.l.b16 %v1051
    %v1097 = vunpack.c.l.b16 %v1052
    %v1098 = vunpack.c.l.b16 %v1053
    %v1099 = vunpack.c.l.b16 %v1054
    %v1100 = vunpack.c.l.b16 %v1055
    %v1101 = vunpack.c.l.b16 %v1056
    %v1102 = vunpack.c.l.b16 %v1057
    %v1103 = vunpack.c.l.b16 %v1058
    %v1104 = vunpack.c.l.b16 %v1059
    %v1105 = vunpack.c.l.b16 %v1060
    %v1106 = vunpack.c.l.b16 %v1061
    %v1107 = vpack.c.b16 %v1092, %v1091
    %v1108 = vpack.c.b16 %v1094, %v1093
    %v1109 = vpack.c.b16 %v1096, %v1095
    %v1110 = vpack.c.b16 %v1098, %v1097
    %v1111 = vpack.c.b16 %v1100, %v1099
    %v1112 = vpack.c.b16 %v1102, %v1101
    %v1113 = vpack.c.b16 %v1104, %v1103
    %v1114 = vpack.c.b16 %v1106, %v1105
    %1123 = vmatprep.subr.bf16.mxu0 0
    %1124 = vmatpush1.bf16.msra.mxu0 %v1107
    %1125 = vmatprep.subr.bf16.mxu0 0
    %1126 = vmatpush1.bf16.msra.mxu0 %v1108
    %1127 = vmatprep.subr.bf16.mxu0 0
    %1128 = vmatpush1.bf16.msra.mxu0 %v1109
    %1129 = vmatprep.subr.bf16.mxu0 0
    %1130 = vmatpush1.bf16.msra.mxu0 %v1110
    %1131 = vmatprep.subr.bf16.mxu0 0
    %1132 = vmatpush1.bf16.msra.mxu0 %v1111
    %1133 = vmatprep.subr.bf16.mxu0 0
    %1134 = vmatpush1.bf16.msra.mxu0 %v1112
    %1135 = vmatprep.subr.bf16.mxu0 0
    %1136 = vmatpush1.bf16.msra.mxu0 %v1113
    %1137 = vmatprep.subr.bf16.mxu0 0
    %1138 = vmatpush1.bf16.msra.mxu0 %v1114
    %1139 = vmatprep.subr.bf16.mxu0 0
    %1140 = vmatpush1.bf16.msra.mxu0 0
    %1141 = vmatprep.subr.bf16.mxu0 0
    %1142 = vmatpush1.bf16.msra.mxu0 0
    %1143 = vmatprep.subr.bf16.mxu0 0
    %1144 = vmatpush1.bf16.msra.mxu0 0
    %1145 = vmatprep.subr.bf16.mxu0 0
    %1146 = vmatpush1.bf16.msra.mxu0 0
    %1147 = vmatprep.subr.bf16.mxu0 0
    %1148 = vmatpush1.bf16.msra.mxu0 0
    %1149 = vmatprep.subr.bf16.mxu0 0
    %1150 = vmatpush1.bf16.msra.mxu0 0
    %1151 = vmatprep.subr.bf16.mxu0 0
    %1152 = vmatpush1.bf16.msra.mxu0 0
    %1153 = vmatprep.subr.bf16.mxu0 0
    %1154 = vmatpush1.bf16.msra.mxu0 0
    %1155 = vmatprep.mubr.bf16.mxu0 0
    %1156 = vmatmul.mubr.bf16.gmra.mrb[0].mxu0 %v1073
    %v1157 = vpop.f32.mrb[0].mxu0
    %v1158 = vadd.f32 %v1067, %v1157
    %v1159 = vpop.f32.mrb[0].mxu0
    %v1160 = vpop.f32.mrb[0].mxu0
    %v1161 = vadd.f32 %v1067, %v1160
    %v1162 = vpop.f32.mrb[0].mxu0
    %1163 = vdwg.mxu0
    %1164 = vst [vmem:[#allocation12] sm:$0xff] %v1158
    %1165 = vst [vmem:[#allocation12 + $0x8] sm:$0xff] %v1161
    // Predicated region
    $region46: #{tpu_custom_call.1} parent=1 // pred_check
      _
    $region47: #{tpu_custom_call.1} parent=1 // pred_check_branch
      %1167 = sbr.rel (0) target = $region49
    $region48: #{tpu_custom_call.1} parent=1 // pred_region
      %s1169 = ssub.s32 256, 256
      %1170 = vsyncadd [#allocation5], %s1169
      %s1171 = sshll.u32 [#allocation12], 4
      %s1172 = int_to_ptr.vmem [resolvable:$true] %s1171
      %1177 = dma.vmem_to_hbm [thread:$0]  %s1172, 256, %s6, [#allocation5], 128, 128, 8
    $region49: #{tpu_custom_call.1} parent=1 // pred_fallthru
      _
    // Predicated region
    $region50: #{tpu_custom_call.1} parent=1 // pred_check
      _
    $region51: #{tpu_custom_call.1} parent=1 // pred_check_branch
      %1179 = sbr.rel (0) target = $region53
    $region52: #{tpu_custom_call.1} parent=1 // pred_region
      %1180 = dma.done [#allocation5], 256
    $region53: #{tpu_custom_call.1} parent=1 // pred_fallthru
      _
    %1181 = vsyncpa [#allocation4], 1
    %1182 = vsyncpa [#allocation7], 1
    %1183 = vsyncpa [#allocation10], 1
    %1184 = vsyncpa [#allocation5], 1

</llo_original>
